<compile_context>
chip_gen: v7x
topology: tpu7x:2x2x1
jax: 0.10.0
libtpu: 0.0.40
codegen_flags: <defaults>
</compile_context>

<pallas_src>
import math
import functools

import jax
import jax.numpy as jnp
from jax import lax
from jax.experimental import pallas as pl
from jax.experimental.pallas import tpu as pltpu


def _self_attention_kernel(x_ref, wqkv_ref, bqkv_ref, o_ref,
                           *, num_heads, head_dim, block_b):
    # x_ref: (block_b, S, D); wqkv_ref: (D, 3D); bqkv_ref: (1, 3D); o_ref: (block_b, S, D)
    bb, S, D = x_ref.shape

    # Flatten (batch, seq) so the fused QKV projection is a single wide MXU matmul
    # over bb*S rows instead of bb separate narrow ones.
    x = x_ref[...].reshape(bb * S, D).astype(jnp.float32)

    # Fused QKV projection: one MXU pass with N = 3D.
    qkv = jnp.dot(x, wqkv_ref[...],
                  preferred_element_type=jnp.float32) + bqkv_ref[...]   # (bb*S, 3D)

    # Fold the attention scale into q once (S*D multiplies instead of S*S per head).
    scale = 1.0 / math.sqrt(head_dim)
    q = qkv[:, :D] * scale
    k = qkv[:, D:2 * D]
    v = qkv[:, 2 * D:]

    # Contract the last dims directly -> no XLU transpose of K per head.
    contract_last = (((1,), (1,)), ((), ()))

    for b in range(bb):                       # static; block_b is 1 or B (both tiny)
        r0 = b * S
        ctx_heads = []
        for h in range(num_heads):            # static head loop
            c0 = h * head_dim
            qh = q[r0:r0 + S, c0:c0 + head_dim]          # (S, Dh)
            kh = k[r0:r0 + S, c0:c0 + head_dim]          # (S, Dh)
            vh = v[r0:r0 + S, c0:c0 + head_dim]          # (S, Dh)

            scores = lax.dot_general(qh, kh, contract_last,
                                     preferred_element_type=jnp.float32)   # (S, S)
            # attention_mask is all zeros in this module -> adding it is a no-op.
            m = jnp.max(scores, axis=-1, keepdims=True)
            e = jnp.exp(scores - m)
            l = jnp.sum(e, axis=-1, keepdims=True)       # (S, 1)

            # Flash-style normalization: unnormalized PV matmul, then one
            # reciprocal-scaled multiply over (S, Dh) instead of (S, S) divides.
            ctx_h = jnp.dot(e, vh, preferred_element_type=jnp.float32)      # (S, Dh)
            ctx_h = ctx_h * pl.reciprocal(l)
            ctx_heads.append(ctx_h)

        # Merge heads in-register and write once (single lane-dense store per row
        # instead of num_heads masked partial stores).
        ctx = jnp.concatenate(ctx_heads, axis=-1)         # (S, D)
        o_ref[b] = jnp.tanh(ctx).astype(o_ref.dtype)

    # TODO(synk): for production BERT shapes (D>=768, large S) switch matmul inputs
    # to bf16 (keep f32 accumulation), tile the KV dimension flash-style instead of
    # materializing full (S,S) scores, and set vmem_limit_bytes for v7x's 64 MiB VMEM.


def self_attention(x, wq, wk, wv, bq, bk, bv, *, num_heads):
    """x: (B, S, D); wq/wk/wv: (D, D) already (in, out); bq/bk/bv: (1, D)."""
    B, S, D = x.shape
    assert D % num_heads == 0
    head_dim = D // num_heads

    # Fuse the three projections into a single (D, 3D) weight / (1, 3D) bias.
    wqkv = jnp.concatenate([wq, wk, wv], axis=1)
    bqkv = jnp.concatenate([bq, bk, bv], axis=1)

    # Grid choice:
    #  * v5e / v6e have a single TensorCore: a grid=(B,) loop is pure per-step
    #    overhead for a kernel this small, so process the whole batch in one step.
    #  * v7x has 2 TensorCores: keep a "parallel" batch axis so both cores get work.
    try:
        kind = jax.devices()[0].device_kind.lower()
    except Exception:
        kind = ""
    block_b = 1 if ("v7" in kind and B >= 2) else B
    grid = (B // block_b,)

    kernel = functools.partial(_self_attention_kernel,
                               num_heads=num_heads, head_dim=head_dim,
                               block_b=block_b)

    grid_spec = pltpu.PrefetchScalarGridSpec(
        num_scalar_prefetch=0,
        grid=grid,
        in_specs=[
            pl.BlockSpec((block_b, S, D), lambda i: (i, 0, 0)),   # x (batch tile)
            pl.BlockSpec((D, 3 * D), lambda i: (0, 0)),           # fused Wqkv
            pl.BlockSpec((1, 3 * D), lambda i: (0, 0)),           # fused bqkv
        ],
        out_specs=pl.BlockSpec((block_b, S, D), lambda i: (i, 0, 0)),
    )

    return pl.pallas_call(
        kernel,
        out_shape=jax.ShapeDtypeStruct((B, S, D), jnp.float32),
        grid_spec=grid_spec,
        compiler_params=pltpu.CompilerParams(
            dimension_semantics=("parallel",)),
    )(x, wqkv, bqkv)


def reference(x, wq, wk, wv, bq, bk, bv, *, num_heads):
    """Pure-JAX reference of BertSelfAttention + tanh (zero mask, eval mode)."""
    B, S, D = x.shape
    Dh = D // num_heads
    q = x @ wq + bq
    k = x @ wk + bk
    v = x @ wv + bv

    def split(t):  # (B, S, D) -> (B, H, S, Dh)
        return t.reshape(B, S, num_heads, Dh).transpose(0, 2, 1, 3)

    qh, kh, vh = split(q), split(k), split(v)
    scores = jnp.einsum('bhsd,bhtd->bhst', qh, kh) / math.sqrt(Dh)
    probs = jax.nn.softmax(scores, axis=-1)
    ctx = jnp.einsum('bhst,bhtd->bhsd', probs, vh)
    ctx = ctx.transpose(0, 2, 1, 3).reshape(B, S, D)
    return jnp.tanh(ctx)


if __name__ == "__main__":
    # Small config consistent with the module: batch=2, seq=8, hidden=32, heads=4.
    B, S, D, H = 2, 8, 32, 4

    key = jax.random.PRNGKey(0)
    kx, kq, kk, kv, kbq, kbk, kbv = jax.random.split(key, 7)

    x = jax.random.normal(kx, (B, S, D), dtype=jnp.float32)

    # Deterministic "BERT-like" init (std=0.02). Weights stored as (D_in, D_out)
    # so the kernel computes x @ W + b (equivalent to PyTorch's x @ W^T + b).
    wq = 0.02 * jax.random.normal(kq, (D, D), dtype=jnp.float32)
    wk = 0.02 * jax.random.normal(kk, (D, D), dtype=jnp.float32)
    wv = 0.02 * jax.random.normal(kv, (D, D), dtype=jnp.float32)
    bq = 0.02 * jax.random.normal(kbq, (1, D), dtype=jnp.float32)
    bk = 0.02 * jax.random.normal(kbk, (1, D), dtype=jnp.float32)
    bv = 0.02 * jax.random.normal(kbv, (1, D), dtype=jnp.float32)

    out = self_attention(x, wq, wk, wv, bq, bk, bv, num_heads=H)
    out = jax.block_until_ready(out)

    ref = reference(x, wq, wk, wv, bq, bk, bv, num_heads=H)
    assert out.shape == (B, S, D)
    assert jnp.allclose(out, ref, atol=1e-5, rtol=1e-5), \
        f"max err {jnp.max(jnp.abs(out - ref))}"

    print("KERNEL_OK")
</pallas_src>

<mosaic_0001>
module attributes {stable_mosaic.version = 11 : i64} {
  func.func @_self_attention_kernel(%arg0: i32, %arg1: memref<2x8x32xf32, #tpu.memory_space<vmem>>, %arg2: memref<32x96xf32, #tpu.memory_space<vmem>>, %arg3: memref<1x96xf32, #tpu.memory_space<vmem>>, %arg4: memref<2x8x32xf32, #tpu.memory_space<vmem>>) attributes {dimension_semantics = [#tpu.dimension_semantics<parallel>], iteration_bounds = array<i64: 1>, scalar_prefetch = 0 : i64, scratch_operands = 0 : i64, tpu.core_type = #tpu.core_type<tc>, window_params = [{transform_indices = @transform_0, window_bounds = array<i64: 2, 8, 32>}, {pipeline_mode = #tpu.pipeline_mode<synchronous>, transform_indices = @transform_1, window_bounds = array<i64: 32, 96>}, {pipeline_mode = #tpu.pipeline_mode<synchronous>, transform_indices = @transform_2, window_bounds = array<i64: 1, 96>}, {transform_indices = @transform_3, window_bounds = array<i64: 2, 8, 32>}]} {
    %c0 = arith.constant 0 : index
    %c0_0 = arith.constant 0 : index
    %c0_1 = arith.constant 0 : index
    %0 = vector.load %arg1[%c0, %c0_0, %c0_1] : memref<2x8x32xf32, #tpu.memory_space<vmem>>, vector<2x8x32xf32>
    %1 = vector.shape_cast %0 : vector<2x8x32xf32> to vector<16x32xf32>
    %c0_2 = arith.constant 0 : index
    %c0_3 = arith.constant 0 : index
    %2 = vector.load %arg2[%c0_2, %c0_3] : memref<32x96xf32, #tpu.memory_space<vmem>>, vector<32x96xf32>
    %cst = arith.constant dense<0.000000e+00> : vector<16x96xf32>
    %3 = tpu.matmul %1, %2, %cst {dimension_numbers = #tpu.dot_dimension_numbers<[1], [0], [0], [1], [0, 0, 1, 1], [], []>} : vector<16x32xf32>, vector<32x96xf32>, vector<16x96xf32> -> vector<16x96xf32>
    %c0_4 = arith.constant 0 : index
    %c0_5 = arith.constant 0 : index
    %4 = vector.load %arg3[%c0_4, %c0_5] : memref<1x96xf32, #tpu.memory_space<vmem>>, vector<1x96xf32>
    %5 = vector.broadcast %4 : vector<1x96xf32> to vector<16x96xf32>
    %6 = arith.addf %3, %5 : vector<16x96xf32>
    %7 = vector.extract_strided_slice %6 {offsets = [0, 0], sizes = [16, 32], strides = [1, 1]} : vector<16x96xf32> to vector<16x32xf32>
    %cst_6 = arith.constant 0.353553385 : f32
    %8 = vector.broadcast %cst_6 : f32 to vector<16x32xf32>
    %9 = arith.mulf %7, %8 : vector<16x32xf32>
    %10 = vector.extract_strided_slice %6 {offsets = [0, 32], sizes = [16, 32], strides = [1, 1]} : vector<16x96xf32> to vector<16x32xf32>
    %11 = vector.extract_strided_slice %6 {offsets = [0, 64], sizes = [16, 32], strides = [1, 1]} : vector<16x96xf32> to vector<16x32xf32>
    %12 = vector.extract_strided_slice %9 {offsets = [0, 0], sizes = [8, 8], strides = [1, 1]} : vector<16x32xf32> to vector<8x8xf32>
    %13 = vector.extract_strided_slice %10 {offsets = [0, 0], sizes = [8, 8], strides = [1, 1]} : vector<16x32xf32> to vector<8x8xf32>
    %14 = vector.extract_strided_slice %11 {offsets = [0, 0], sizes = [8, 8], strides = [1, 1]} : vector<16x32xf32> to vector<8x8xf32>
    %cst_7 = arith.constant dense<0.000000e+00> : vector<8x8xf32>
    %15 = tpu.matmul %12, %13, %cst_7 {dimension_numbers = #tpu.dot_dimension_numbers<[1], [1], [0], [0], [0, 0, 1, 0], [], []>} : vector<8x8xf32>, vector<8x8xf32>, vector<8x8xf32> -> vector<8x8xf32>
    %cst_8 = arith.constant dense<0xFF800000> : vector<8xf32>
    %16 = vector.multi_reduction <maximumf>, %15, %cst_8 [1] : vector<8x8xf32> to vector<8xf32>
    %17 = vector.shape_cast %16 : vector<8xf32> to vector<8x1xf32>
    %18 = vector.broadcast %17 : vector<8x1xf32> to vector<8x8xf32>
    %19 = arith.subf %15, %18 : vector<8x8xf32>
    %20 = math.exp %19 : vector<8x8xf32>
    %cst_9 = arith.constant dense<0.000000e+00> : vector<8xf32>
    %21 = vector.multi_reduction <add>, %20, %cst_9 [1] : vector<8x8xf32> to vector<8xf32>
    %22 = vector.shape_cast %21 : vector<8xf32> to vector<8x1xf32>
    %cst_10 = arith.constant dense<0.000000e+00> : vector<8x8xf32>
    %23 = tpu.matmul %20, %14, %cst_10 {dimension_numbers = #tpu.dot_dimension_numbers<[1], [0], [0], [1], [0, 0, 1, 1], [], []>} : vector<8x8xf32>, vector<8x8xf32>, vector<8x8xf32> -> vector<8x8xf32>
    %24 = tpu.reciprocal %22 : vector<8x1xf32> -> vector<8x1xf32>
    %25 = vector.broadcast %24 : vector<8x1xf32> to vector<8x8xf32>
    %26 = arith.mulf %23, %25 : vector<8x8xf32>
    %27 = vector.extract_strided_slice %9 {offsets = [0, 8], sizes = [8, 8], strides = [1, 1]} : vector<16x32xf32> to vector<8x8xf32>
    %28 = vector.extract_strided_slice %10 {offsets = [0, 8], sizes = [8, 8], strides = [1, 1]} : vector<16x32xf32> to vector<8x8xf32>
    %29 = vector.extract_strided_slice %11 {offsets = [0, 8], sizes = [8, 8], strides = [1, 1]} : vector<16x32xf32> to vector<8x8xf32>
    %cst_11 = arith.constant dense<0.000000e+00> : vector<8x8xf32>
    %30 = tpu.matmul %27, %28, %cst_11 {dimension_numbers = #tpu.dot_dimension_numbers<[1], [1], [0], [0], [0, 0, 1, 0], [], []>} : vector<8x8xf32>, vector<8x8xf32>, vector<8x8xf32> -> vector<8x8xf32>
    %cst_12 = arith.constant dense<0xFF800000> : vector<8xf32>
    %31 = vector.multi_reduction <maximumf>, %30, %cst_12 [1] : vector<8x8xf32> to vector<8xf32>
    %32 = vector.shape_cast %31 : vector<8xf32> to vector<8x1xf32>
    %33 = vector.broadcast %32 : vector<8x1xf32> to vector<8x8xf32>
    %34 = arith.subf %30, %33 : vector<8x8xf32>
    %35 = math.exp %34 : vector<8x8xf32>
    %cst_13 = arith.constant dense<0.000000e+00> : vector<8xf32>
    %36 = vector.multi_reduction <add>, %35, %cst_13 [1] : vector<8x8xf32> to vector<8xf32>
    %37 = vector.shape_cast %36 : vector<8xf32> to vector<8x1xf32>
    %cst_14 = arith.constant dense<0.000000e+00> : vector<8x8xf32>
    %38 = tpu.matmul %35, %29, %cst_14 {dimension_numbers = #tpu.dot_dimension_numbers<[1], [0], [0], [1], [0, 0, 1, 1], [], []>} : vector<8x8xf32>, vector<8x8xf32>, vector<8x8xf32> -> vector<8x8xf32>
    %39 = tpu.reciprocal %37 : vector<8x1xf32> -> vector<8x1xf32>
    %40 = vector.broadcast %39 : vector<8x1xf32> to vector<8x8xf32>
    %41 = arith.mulf %38, %40 : vector<8x8xf32>
    %42 = vector.extract_strided_slice %9 {offsets = [0, 16], sizes = [8, 8], strides = [1, 1]} : vector<16x32xf32> to vector<8x8xf32>
    %43 = vector.extract_strided_slice %10 {offsets = [0, 16], sizes = [8, 8], strides = [1, 1]} : vector<16x32xf32> to vector<8x8xf32>
    %44 = vector.extract_strided_slice %11 {offsets = [0, 16], sizes = [8, 8], strides = [1, 1]} : vector<16x32xf32> to vector<8x8xf32>
    %cst_15 = arith.constant dense<0.000000e+00> : vector<8x8xf32>
    %45 = tpu.matmul %42, %43, %cst_15 {dimension_numbers = #tpu.dot_dimension_numbers<[1], [1], [0], [0], [0, 0, 1, 0], [], []>} : vector<8x8xf32>, vector<8x8xf32>, vector<8x8xf32> -> vector<8x8xf32>
    %cst_16 = arith.constant dense<0xFF800000> : vector<8xf32>
    %46 = vector.multi_reduction <maximumf>, %45, %cst_16 [1] : vector<8x8xf32> to vector<8xf32>
    %47 = vector.shape_cast %46 : vector<8xf32> to vector<8x1xf32>
    %48 = vector.broadcast %47 : vector<8x1xf32> to vector<8x8xf32>
    %49 = arith.subf %45, %48 : vector<8x8xf32>
    %50 = math.exp %49 : vector<8x8xf32>
    %cst_17 = arith.constant dense<0.000000e+00> : vector<8xf32>
    %51 = vector.multi_reduction <add>, %50, %cst_17 [1] : vector<8x8xf32> to vector<8xf32>
    %52 = vector.shape_cast %51 : vector<8xf32> to vector<8x1xf32>
    %cst_18 = arith.constant dense<0.000000e+00> : vector<8x8xf32>
    %53 = tpu.matmul %50, %44, %cst_18 {dimension_numbers = #tpu.dot_dimension_numbers<[1], [0], [0], [1], [0, 0, 1, 1], [], []>} : vector<8x8xf32>, vector<8x8xf32>, vector<8x8xf32> -> vector<8x8xf32>
    %54 = tpu.reciprocal %52 : vector<8x1xf32> -> vector<8x1xf32>
    %55 = vector.broadcast %54 : vector<8x1xf32> to vector<8x8xf32>
    %56 = arith.mulf %53, %55 : vector<8x8xf32>
    %57 = vector.extract_strided_slice %9 {offsets = [0, 24], sizes = [8, 8], strides = [1, 1]} : vector<16x32xf32> to vector<8x8xf32>
    %58 = vector.extract_strided_slice %10 {offsets = [0, 24], sizes = [8, 8], strides = [1, 1]} : vector<16x32xf32> to vector<8x8xf32>
    %59 = vector.extract_strided_slice %11 {offsets = [0, 24], sizes = [8, 8], strides = [1, 1]} : vector<16x32xf32> to vector<8x8xf32>
    %cst_19 = arith.constant dense<0.000000e+00> : vector<8x8xf32>
    %60 = tpu.matmul %57, %58, %cst_19 {dimension_numbers = #tpu.dot_dimension_numbers<[1], [1], [0], [0], [0, 0, 1, 0], [], []>} : vector<8x8xf32>, vector<8x8xf32>, vector<8x8xf32> -> vector<8x8xf32>
    %cst_20 = arith.constant dense<0xFF800000> : vector<8xf32>
    %61 = vector.multi_reduction <maximumf>, %60, %cst_20 [1] : vector<8x8xf32> to vector<8xf32>
    %62 = vector.shape_cast %61 : vector<8xf32> to vector<8x1xf32>
    %63 = vector.broadcast %62 : vector<8x1xf32> to vector<8x8xf32>
    %64 = arith.subf %60, %63 : vector<8x8xf32>
    %65 = math.exp %64 : vector<8x8xf32>
    %cst_21 = arith.constant dense<0.000000e+00> : vector<8xf32>
    %66 = vector.multi_reduction <add>, %65, %cst_21 [1] : vector<8x8xf32> to vector<8xf32>
    %67 = vector.shape_cast %66 : vector<8xf32> to vector<8x1xf32>
    %cst_22 = arith.constant dense<0.000000e+00> : vector<8x8xf32>
    %68 = tpu.matmul %65, %59, %cst_22 {dimension_numbers = #tpu.dot_dimension_numbers<[1], [0], [0], [1], [0, 0, 1, 1], [], []>} : vector<8x8xf32>, vector<8x8xf32>, vector<8x8xf32> -> vector<8x8xf32>
    %69 = tpu.reciprocal %67 : vector<8x1xf32> -> vector<8x1xf32>
    %70 = vector.broadcast %69 : vector<8x1xf32> to vector<8x8xf32>
    %71 = arith.mulf %68, %70 : vector<8x8xf32>
    %72 = tpu.concatenate %26, %41, %56, %71 in 1 : vector<8x8xf32>, vector<8x8xf32>, vector<8x8xf32>, vector<8x8xf32> -> vector<8x32xf32>
    %73 = math.tanh %72 : vector<8x32xf32>
    %c0_23 = arith.constant 0 : index
    %c0_24 = arith.constant 0 : index
    %c0_25 = arith.constant 0 : index
    %74 = vector.load %arg4[%c0_23, %c0_24, %c0_25] : memref<2x8x32xf32, #tpu.memory_space<vmem>>, vector<1x8x32xf32>
    %75 = vector.shape_cast %74 : vector<1x8x32xf32> to vector<8x32xf32>
    %76 = vector.shape_cast %73 : vector<8x32xf32> to vector<1x8x32xf32>
    tpu.vector_store %arg4[%c0_23, %c0_24, %c0_25], %76 {strides = array<i32>} : memref<2x8x32xf32, #tpu.memory_space<vmem>>, vector<1x8x32xf32>,
    %77 = vector.extract_strided_slice %9 {offsets = [8, 0], sizes = [8, 8], strides = [1, 1]} : vector<16x32xf32> to vector<8x8xf32>
    %78 = vector.extract_strided_slice %10 {offsets = [8, 0], sizes = [8, 8], strides = [1, 1]} : vector<16x32xf32> to vector<8x8xf32>
    %79 = vector.extract_strided_slice %11 {offsets = [8, 0], sizes = [8, 8], strides = [1, 1]} : vector<16x32xf32> to vector<8x8xf32>
    %cst_26 = arith.constant dense<0.000000e+00> : vector<8x8xf32>
    %80 = tpu.matmul %77, %78, %cst_26 {dimension_numbers = #tpu.dot_dimension_numbers<[1], [1], [0], [0], [0, 0, 1, 0], [], []>} : vector<8x8xf32>, vector<8x8xf32>, vector<8x8xf32> -> vector<8x8xf32>
    %cst_27 = arith.constant dense<0xFF800000> : vector<8xf32>
    %81 = vector.multi_reduction <maximumf>, %80, %cst_27 [1] : vector<8x8xf32> to vector<8xf32>
    %82 = vector.shape_cast %81 : vector<8xf32> to vector<8x1xf32>
    %83 = vector.broadcast %82 : vector<8x1xf32> to vector<8x8xf32>
    %84 = arith.subf %80, %83 : vector<8x8xf32>
    %85 = math.exp %84 : vector<8x8xf32>
    %cst_28 = arith.constant dense<0.000000e+00> : vector<8xf32>
    %86 = vector.multi_reduction <add>, %85, %cst_28 [1] : vector<8x8xf32> to vector<8xf32>
    %87 = vector.shape_cast %86 : vector<8xf32> to vector<8x1xf32>
    %cst_29 = arith.constant dense<0.000000e+00> : vector<8x8xf32>
    %88 = tpu.matmul %85, %79, %cst_29 {dimension_numbers = #tpu.dot_dimension_numbers<[1], [0], [0], [1], [0, 0, 1, 1], [], []>} : vector<8x8xf32>, vector<8x8xf32>, vector<8x8xf32> -> vector<8x8xf32>
    %89 = tpu.reciprocal %87 : vector<8x1xf32> -> vector<8x1xf32>
    %90 = vector.broadcast %89 : vector<8x1xf32> to vector<8x8xf32>
    %91 = arith.mulf %88, %90 : vector<8x8xf32>
    %92 = vector.extract_strided_slice %9 {offsets = [8, 8], sizes = [8, 8], strides = [1, 1]} : vector<16x32xf32> to vector<8x8xf32>
    %93 = vector.extract_strided_slice %10 {offsets = [8, 8], sizes = [8, 8], strides = [1, 1]} : vector<16x32xf32> to vector<8x8xf32>
    %94 = vector.extract_strided_slice %11 {offsets = [8, 8], sizes = [8, 8], strides = [1, 1]} : vector<16x32xf32> to vector<8x8xf32>
    %cst_30 = arith.constant dense<0.000000e+00> : vector<8x8xf32>
    %95 = tpu.matmul %92, %93, %cst_30 {dimension_numbers = #tpu.dot_dimension_numbers<[1], [1], [0], [0], [0, 0, 1, 0], [], []>} : vector<8x8xf32>, vector<8x8xf32>, vector<8x8xf32> -> vector<8x8xf32>
    %cst_31 = arith.constant dense<0xFF800000> : vector<8xf32>
    %96 = vector.multi_reduction <maximumf>, %95, %cst_31 [1] : vector<8x8xf32> to vector<8xf32>
    %97 = vector.shape_cast %96 : vector<8xf32> to vector<8x1xf32>
    %98 = vector.broadcast %97 : vector<8x1xf32> to vector<8x8xf32>
    %99 = arith.subf %95, %98 : vector<8x8xf32>
    %100 = math.exp %99 : vector<8x8xf32>
    %cst_32 = arith.constant dense<0.000000e+00> : vector<8xf32>
    %101 = vector.multi_reduction <add>, %100, %cst_32 [1] : vector<8x8xf32> to vector<8xf32>
    %102 = vector.shape_cast %101 : vector<8xf32> to vector<8x1xf32>
    %cst_33 = arith.constant dense<0.000000e+00> : vector<8x8xf32>
    %103 = tpu.matmul %100, %94, %cst_33 {dimension_numbers = #tpu.dot_dimension_numbers<[1], [0], [0], [1], [0, 0, 1, 1], [], []>} : vector<8x8xf32>, vector<8x8xf32>, vector<8x8xf32> -> vector<8x8xf32>
    %104 = tpu.reciprocal %102 : vector<8x1xf32> -> vector<8x1xf32>
    %105 = vector.broadcast %104 : vector<8x1xf32> to vector<8x8xf32>
    %106 = arith.mulf %103, %105 : vector<8x8xf32>
    %107 = vector.extract_strided_slice %9 {offsets = [8, 16], sizes = [8, 8], strides = [1, 1]} : vector<16x32xf32> to vector<8x8xf32>
    %108 = vector.extract_strided_slice %10 {offsets = [8, 16], sizes = [8, 8], strides = [1, 1]} : vector<16x32xf32> to vector<8x8xf32>
    %109 = vector.extract_strided_slice %11 {offsets = [8, 16], sizes = [8, 8], strides = [1, 1]} : vector<16x32xf32> to vector<8x8xf32>
    %cst_34 = arith.constant dense<0.000000e+00> : vector<8x8xf32>
    %110 = tpu.matmul %107, %108, %cst_34 {dimension_numbers = #tpu.dot_dimension_numbers<[1], [1], [0], [0], [0, 0, 1, 0], [], []>} : vector<8x8xf32>, vector<8x8xf32>, vector<8x8xf32> -> vector<8x8xf32>
    %cst_35 = arith.constant dense<0xFF800000> : vector<8xf32>
    %111 = vector.multi_reduction <maximumf>, %110, %cst_35 [1] : vector<8x8xf32> to vector<8xf32>
    %112 = vector.shape_cast %111 : vector<8xf32> to vector<8x1xf32>
    %113 = vector.broadcast %112 : vector<8x1xf32> to vector<8x8xf32>
    %114 = arith.subf %110, %113 : vector<8x8xf32>
    %115 = math.exp %114 : vector<8x8xf32>
    %cst_36 = arith.constant dense<0.000000e+00> : vector<8xf32>
    %116 = vector.multi_reduction <add>, %115, %cst_36 [1] : vector<8x8xf32> to vector<8xf32>
    %117 = vector.shape_cast %116 : vector<8xf32> to vector<8x1xf32>
    %cst_37 = arith.constant dense<0.000000e+00> : vector<8x8xf32>
    %118 = tpu.matmul %115, %109, %cst_37 {dimension_numbers = #tpu.dot_dimension_numbers<[1], [0], [0], [1], [0, 0, 1, 1], [], []>} : vector<8x8xf32>, vector<8x8xf32>, vector<8x8xf32> -> vector<8x8xf32>
    %119 = tpu.reciprocal %117 : vector<8x1xf32> -> vector<8x1xf32>
    %120 = vector.broadcast %119 : vector<8x1xf32> to vector<8x8xf32>
    %121 = arith.mulf %118, %120 : vector<8x8xf32>
    %122 = vector.extract_strided_slice %9 {offsets = [8, 24], sizes = [8, 8], strides = [1, 1]} : vector<16x32xf32> to vector<8x8xf32>
    %123 = vector.extract_strided_slice %10 {offsets = [8, 24], sizes = [8, 8], strides = [1, 1]} : vector<16x32xf32> to vector<8x8xf32>
    %124 = vector.extract_strided_slice %11 {offsets = [8, 24], sizes = [8, 8], strides = [1, 1]} : vector<16x32xf32> to vector<8x8xf32>
    %cst_38 = arith.constant dense<0.000000e+00> : vector<8x8xf32>
    %125 = tpu.matmul %122, %123, %cst_38 {dimension_numbers = #tpu.dot_dimension_numbers<[1], [1], [0], [0], [0, 0, 1, 0], [], []>} : vector<8x8xf32>, vector<8x8xf32>, vector<8x8xf32> -> vector<8x8xf32>
    %cst_39 = arith.constant dense<0xFF800000> : vector<8xf32>
    %126 = vector.multi_reduction <maximumf>, %125, %cst_39 [1] : vector<8x8xf32> to vector<8xf32>
    %127 = vector.shape_cast %126 : vector<8xf32> to vector<8x1xf32>
    %128 = vector.broadcast %127 : vector<8x1xf32> to vector<8x8xf32>
    %129 = arith.subf %125, %128 : vector<8x8xf32>
    %130 = math.exp %129 : vector<8x8xf32>
    %cst_40 = arith.constant dense<0.000000e+00> : vector<8xf32>
    %131 = vector.multi_reduction <add>, %130, %cst_40 [1] : vector<8x8xf32> to vector<8xf32>
    %132 = vector.shape_cast %131 : vector<8xf32> to vector<8x1xf32>
    %cst_41 = arith.constant dense<0.000000e+00> : vector<8x8xf32>
    %133 = tpu.matmul %130, %124, %cst_41 {dimension_numbers = #tpu.dot_dimension_numbers<[1], [0], [0], [1], [0, 0, 1, 1], [], []>} : vector<8x8xf32>, vector<8x8xf32>, vector<8x8xf32> -> vector<8x8xf32>
    %134 = tpu.reciprocal %132 : vector<8x1xf32> -> vector<8x1xf32>
    %135 = vector.broadcast %134 : vector<8x1xf32> to vector<8x8xf32>
    %136 = arith.mulf %133, %135 : vector<8x8xf32>
    %137 = tpu.concatenate %91, %106, %121, %136 in 1 : vector<8x8xf32>, vector<8x8xf32>, vector<8x8xf32>, vector<8x8xf32> -> vector<8x32xf32>
    %138 = math.tanh %137 : vector<8x32xf32>
    %c1 = arith.constant 1 : index
    %c0_42 = arith.constant 0 : index
    %c0_43 = arith.constant 0 : index
    %139 = vector.load %arg4[%c1, %c0_42, %c0_43] : memref<2x8x32xf32, #tpu.memory_space<vmem>>, vector<1x8x32xf32>
    %140 = vector.shape_cast %139 : vector<1x8x32xf32> to vector<8x32xf32>
    %141 = vector.shape_cast %138 : vector<8x32xf32> to vector<1x8x32xf32>
    tpu.vector_store %arg4[%c1, %c0_42, %c0_43], %141 {strides = array<i32>} : memref<2x8x32xf32, #tpu.memory_space<vmem>>, vector<1x8x32xf32>,
    return
  }
  func.func @transform_0(%arg0: i32) -> (i32, i32, i32) {
    %c0_i32 = arith.constant 0 : i32
    %c0_i32_0 = arith.constant 0 : i32
    %c0_i32_1 = arith.constant 0 : i32
    return %arg0, %c0_i32, %c0_i32_0 : i32, i32, i32
  }
  func.func @transform_1(%arg0: i32) -> (i32, i32) {
    %c0_i32 = arith.constant 0 : i32
    %c0_i32_0 = arith.constant 0 : i32
    %c0_i32_1 = arith.constant 0 : i32
    return %c0_i32, %c0_i32_0 : i32, i32
  }
  func.func @transform_2(%arg0: i32) -> (i32, i32) {
    %c0_i32 = arith.constant 0 : i32
    %c0_i32_0 = arith.constant 0 : i32
    %c0_i32_1 = arith.constant 0 : i32
    return %c0_i32, %c0_i32_0 : i32, i32
  }
  func.func @transform_3(%arg0: i32) -> (i32, i32, i32) {
    %c0_i32 = arith.constant 0 : i32
    %c0_i32_0 = arith.constant 0 : i32
    %c0_i32_1 = arith.constant 0 : i32
    return %arg0, %c0_i32, %c0_i32_0 : i32, i32, i32
  }
}

</mosaic_0001>

<llo_original>
// kernel: tpu_custom_call.1
$region0: #{tpu_custom_call.1}
  #allocation0 [shape = 'u32[]', space=smem, size = 0x4, offset = 0x4, fixed_abs, tag = 'smem constant byte address 0x4 - core index']
  #allocation1 [shape = 'u32[144,128]{1,0:T(1,128)}', space=vmem, size = 0x12000, scoped, tag = 'internal scratch']
  %s0 = inlined_call_operand.hbm [shape: f32[2,8,32], index: 0, kind: input, shape index: {}]
  %s1 = inlined_call_operand.hbm [shape: f32[32,96], index: 1, kind: input, shape index: {}]
  %s2 = inlined_call_operand.vmem [shape: f32[1,96], index: 2, kind: input, shape index: {}]
  %s3 = inlined_call_operand.hbm [shape: f32[2,8,32], index: 3, kind: output, shape index: {}]
  %s4 = sld [smem:[#allocation0]]
  $region30: #{tpu_custom_call.1} parent=0
    _
  %s6 = ssub.s32 1, %s4
  %s7 = scalar_select 0, %s6, %s4
  $region1: #{tpu_custom_call.1} parent=0
    #allocation2 [shape = 'u8[8192]{0}', space=vmem, size = 0x2000, scoped, tag = 'input window, operand 0, single buffered']
    #allocation3 [shape = 's32[1]{0}', space=sflag, size = 0x4, scoped, tag = 'scoped memory for tpu_custom_call.1']
    #allocation4 [shape = 's32[1]{0}', space=sflag, size = 0x4, scoped, tag = 'scoped memory for tpu_custom_call.1']
    #allocation5 [shape = 'u8[16384]{0}', space=vmem, size = 0x4000, scoped, tag = 'input window, operand 1, single buffered']
    #allocation6 [shape = 's32[1]{0}', space=sflag, size = 0x4, scoped, tag = 'scoped memory for tpu_custom_call.1']
    #allocation7 [shape = 'u8[8192]{0}', space=vmem, size = 0x2000, scoped, tag = 'output window, operand 0, single buffered']
    %8 = vsyncpa [#allocation3], 0
    %9 = vsyncpa [#allocation6], 0
    %10 = vsyncpa [#allocation4], 0
    // Predicated region
    $region2: #{tpu_custom_call.1} parent=1 // pred_check
      _
    $region3: #{tpu_custom_call.1} parent=1 // pred_check_branch
      %12 = sbr.rel (0) target = $region5
    $region4: #{tpu_custom_call.1} parent=1 // pred_region
      %s14 = ssub.s32 256, 256
      %15 = vsyncadd [#allocation3], %s14
      %s16 = sshll.u32 [#allocation2], 4
      %s17 = int_to_ptr.vmem [resolvable:$true] %s16
      %22 = dma.hbm_to_vmem [thread:$0]  %s0, 256, %s17, [#allocation3], 128, 128, 8
    $region5: #{tpu_custom_call.1} parent=1 // pred_fallthru
      _
    // Predicated region
    $region6: #{tpu_custom_call.1} parent=1 // pred_check
      _
    $region7: #{tpu_custom_call.1} parent=1 // pred_check_branch
      %24 = sbr.rel (0) target = $region9
    $region8: #{tpu_custom_call.1} parent=1 // pred_region
      %s26 = ssub.s32 512, 512
      %27 = vsyncadd [#allocation6], %s26
      %s28 = sshll.u32 [#allocation5], 4
      %s29 = int_to_ptr.vmem [resolvable:$true] %s28
      %34 = dma.hbm_to_vmem [thread:$0]  %s1, 512, %s29, [#allocation6], 128, 128, 8
    $region9: #{tpu_custom_call.1} parent=1 // pred_fallthru
      _
    // Predicated region
    $region10: #{tpu_custom_call.1} parent=1 // pred_check
      _
    $region11: #{tpu_custom_call.1} parent=1 // pred_check_branch
      %36 = sbr.rel (0) target = $region13
    $region12: #{tpu_custom_call.1} parent=1 // pred_region
      _
    $region13: #{tpu_custom_call.1} parent=1 // pred_fallthru
      _
    // Predicated region
    $region14: #{tpu_custom_call.1} parent=1 // pred_check
      _
    $region15: #{tpu_custom_call.1} parent=1 // pred_check_branch
      %38 = sbr.rel (0) target = $region17
    $region16: #{tpu_custom_call.1} parent=1 // pred_region
      %39 = dma.done [#allocation3], 256
    $region17: #{tpu_custom_call.1} parent=1 // pred_fallthru
      _
    // Predicated region
    $region18: #{tpu_custom_call.1} parent=1 // pred_check
      _
    $region19: #{tpu_custom_call.1} parent=1 // pred_check_branch
      %41 = sbr.rel (0) target = $region21
    $region20: #{tpu_custom_call.1} parent=1 // pred_region
      %42 = dma.done [#allocation6], 512
    $region21: #{tpu_custom_call.1} parent=1 // pred_fallthru
      _
    %v43 = vld [vmem:[#allocation2] sm:$0xff]
    %v44 = vld [vmem:[#allocation2 + $0x8] sm:$0xff]
    %v45 = vld [vmem:[#allocation5] sm:$0xff]
    %v46 = vld [vmem:[#allocation5 + $0x8] sm:$0xff]
    %v47 = vld [vmem:[#allocation5 + $0x10] sm:$0xff]
    %v48 = vld [vmem:[#allocation5 + $0x18] sm:$0xff]
    %v49 = vld [vmem:[%s2] sm:$0x1]
    %v51 = vlaneseq
    %v52 = vshrl.u32 %v51, 7
    %v53 = vsub.s32 0, %v52
    %v54 = vrot.slane %v49, %v53
    %vm56 = vcmask 261120
    %v58 = vsel %vm56, %v43, 0
    %v61 = vsel %vm56, %v44, 0
    %63 = vmatprep.subr.mxu0 0.0
    %64 = vmatpush1.msra.mxu0 %v45
    %65 = vmatprep.subr.mxu0 0.0
    %66 = vmatpush1.msra.mxu0 %v46
    %67 = vmatprep.subr.mxu0 0.0
    %68 = vmatpush1.msra.mxu0 %v47
    %69 = vmatprep.subr.mxu0 0.0
    %70 = vmatpush1.msra.mxu0 %v48
    %71 = vmatprep.subr.mxu0 0.0
    %72 = vmatpush1.msra.mxu0 0.0
    %73 = vmatprep.subr.mxu0 0.0
    %74 = vmatpush1.msra.mxu0 0.0
    %75 = vmatprep.subr.mxu0 0.0
    %76 = vmatpush1.msra.mxu0 0.0
    %77 = vmatprep.subr.mxu0 0.0
    %78 = vmatpush1.msra.mxu0 0.0
    %79 = vmatprep.subr.mxu0 0.0
    %80 = vmatpush1.msra.mxu0 0.0
    %81 = vmatprep.subr.mxu0 0.0
    %82 = vmatpush1.msra.mxu0 0.0
    %83 = vmatprep.subr.mxu0 0.0
    %84 = vmatpush1.msra.mxu0 0.0
    %85 = vmatprep.subr.mxu0 0.0
    %86 = vmatpush1.msra.mxu0 0.0
    %87 = vmatprep.subr.mxu0 0.0
    %88 = vmatpush1.msra.mxu0 0.0
    %89 = vmatprep.subr.mxu0 0.0
    %90 = vmatpush1.msra.mxu0 0.0
    %91 = vmatprep.subr.mxu0 0.0
    %92 = vmatpush1.msra.mxu0 0.0
    %93 = vmatprep.subr.mxu0 0.0
    %94 = vmatpush1.msra.mxu0 0.0
    %95 = vmatprep.subr.mxu0 0.0
    %96 = vmatpush1.msra.mxu0 0.0
    %97 = vmatprep.subr.mxu0 0.0
    %98 = vmatpush1.msra.mxu0 0.0
    %99 = vmatprep.subr.mxu0 0.0
    %100 = vmatpush1.msra.mxu0 0.0
    %101 = vmatprep.subr.mxu0 0.0
    %102 = vmatpush1.msra.mxu0 0.0
    %103 = vmatprep.subr.mxu0 0.0
    %104 = vmatpush1.msra.mxu0 0.0
    %105 = vmatprep.subr.mxu0 0.0
    %106 = vmatpush1.msra.mxu0 0.0
    %107 = vmatprep.subr.mxu0 0.0
    %108 = vmatpush1.msra.mxu0 0.0
    %109 = vmatprep.subr.mxu0 0.0
    %110 = vmatpush1.msra.mxu0 0.0
    %111 = vmatprep.subr.mxu0 0.0
    %112 = vmatpush1.msra.mxu0 0.0
    %113 = vmatprep.subr.mxu0 0.0
    %114 = vmatpush1.msra.mxu0 0.0
    %115 = vmatprep.subr.mxu0 0.0
    %116 = vmatpush1.msra.mxu0 0.0
    %117 = vmatprep.subr.mxu0 0.0
    %118 = vmatpush1.msra.mxu0 0.0
    %119 = vmatprep.subr.mxu0 0.0
    %120 = vmatpush1.msra.mxu0 0.0
    %121 = vmatprep.subr.mxu0 0.0
    %122 = vmatpush1.msra.mxu0 0.0
    %123 = vmatprep.subr.mxu0 0.0
    %124 = vmatpush1.msra.mxu0 0.0
    %125 = vmatprep.subr.mxu0 0.0
    %126 = vmatpush1.msra.mxu0 0.0
    %127 = vmatprep.mubr.f32.mxu0 0.0
    %128 = vmatmul.mubr.f32.gmra.mrb[0].mxu0 %v58
    %v129 = vpop.f32.mrb[0].mxu0
    %v130 = vadd.f32 %v54, %v129
    %v131 = vpop.f32.mrb[0].mxu0
    %132 = vmatprep.mubr.f32.mxu0 0.0
    %133 = vmatmul.mubr.f32.gmra.mrb[0].mxu0 %v61
    %v134 = vpop.f32.mrb[0].mxu0
    %v135 = vadd.f32 %v54, %v134
    %v136 = vpop.f32.mrb[0].mxu0
    %137 = vdwg.mxu0
    %v138 = vmul.f32 %v130, 0.35355338
    %v139 = vmul.f32 %v135, 0.35355338
    %141 = vrot.lane.b32.xlu0 %v130, 96
    %v142 = vpop.permute.xlu0 %141
    %vm143 = vcmask 64512
    %v145 = vsel %vm143, %v138, 0
    %v147 = vsel %vm143, %v142, 0
    %149 = vmatprep.subr.mxu0 0.0
    %150 = vmatpush1.xpose.msra.mxu0 %v147
    %151 = vmatprep.subr.mxu0 0.0
    %152 = vmatpush1.xpose.msra.mxu0 0.0
    %153 = vmatprep.subr.mxu0 0.0
    %154 = vmatpush1.xpose.msra.mxu0 0.0
    %155 = vmatprep.subr.mxu0 0.0
    %156 = vmatpush1.xpose.msra.mxu0 0.0
    %157 = vmatprep.subr.mxu0 0.0
    %158 = vmatpush1.xpose.msra.mxu0 0.0
    %159 = vmatprep.subr.mxu0 0.0
    %160 = vmatpush1.xpose.msra.mxu0 0.0
    %161 = vmatprep.subr.mxu0 0.0
    %162 = vmatpush1.xpose.msra.mxu0 0.0
    %163 = vmatprep.subr.mxu0 0.0
    %164 = vmatpush1.xpose.msra.mxu0 0.0
    %165 = vmatprep.subr.mxu0 0.0
    %166 = vmatpush1.xpose.msra.mxu0 0.0
    %167 = vmatprep.subr.mxu0 0.0
    %168 = vmatpush1.xpose.msra.mxu0 0.0
    %169 = vmatprep.subr.mxu0 0.0
    %170 = vmatpush1.xpose.msra.mxu0 0.0
    %171 = vmatprep.subr.mxu0 0.0
    %172 = vmatpush1.xpose.msra.mxu0 0.0
    %173 = vmatprep.subr.mxu0 0.0
    %174 = vmatpush1.xpose.msra.mxu0 0.0
    %175 = vmatprep.subr.mxu0 0.0
    %176 = vmatpush1.xpose.msra.mxu0 0.0
    %177 = vmatprep.subr.mxu0 0.0
    %178 = vmatpush1.xpose.msra.mxu0 0.0
    %179 = vmatprep.subr.mxu0 0.0
    %180 = vmatpush1.xpose.msra.mxu0 0.0
    %181 = vmatprep.subr.mxu0 0.0
    %182 = vmatpush1.xpose.msra.mxu0 0.0
    %183 = vmatprep.subr.mxu0 0.0
    %184 = vmatpush1.xpose.msra.mxu0 0.0
    %185 = vmatprep.subr.mxu0 0.0
    %186 = vmatpush1.xpose.msra.mxu0 0.0
    %187 = vmatprep.subr.mxu0 0.0
    %188 = vmatpush1.xpose.msra.mxu0 0.0
    %189 = vmatprep.subr.mxu0 0.0
    %190 = vmatpush1.xpose.msra.mxu0 0.0
    %191 = vmatprep.subr.mxu0 0.0
    %192 = vmatpush1.xpose.msra.mxu0 0.0
    %193 = vmatprep.subr.mxu0 0.0
    %194 = vmatpush1.xpose.msra.mxu0 0.0
    %195 = vmatprep.subr.mxu0 0.0
    %196 = vmatpush1.xpose.msra.mxu0 0.0
    %197 = vmatprep.subr.mxu0 0.0
    %198 = vmatpush1.xpose.msra.mxu0 0.0
    %199 = vmatprep.subr.mxu0 0.0
    %200 = vmatpush1.xpose.msra.mxu0 0.0
    %201 = vmatprep.subr.mxu0 0.0
    %202 = vmatpush1.xpose.msra.mxu0 0.0
    %203 = vmatprep.subr.mxu0 0.0
    %204 = vmatpush1.xpose.msra.mxu0 0.0
    %205 = vmatprep.subr.mxu0 0.0
    %206 = vmatpush1.xpose.msra.mxu0 0.0
    %207 = vmatprep.subr.mxu0 0.0
    %208 = vmatpush1.xpose.msra.mxu0 0.0
    %209 = vmatprep.subr.mxu0 0.0
    %210 = vmatpush1.xpose.msra.mxu0 0.0
    %211 = vmatprep.subr.mxu0 0.0
    %212 = vmatpush1.xpose.msra.mxu0 0.0
    %213 = vmatprep.mubr.f32.mxu0 0.0
    %214 = vmatmul.mubr.f32.gmra.mrb[0].mxu0 %v145
    %v215 = vpop.f32.mrb[0].mxu0
    %v216 = vadd.f32 0.0, %v215
    %v217 = vpop.f32.mrb[0].mxu0
    %218 = vdwg.mxu0
    %v219 = vsel %vm143, %v216, -inf
    %220 = vmax.xlane.f32.xlu0 %v219
    %v221 = vpop.xlane.xlu0 %220
    %v222 = vsub.f32 %v216, %v221
    %v223 = vmul.f32 %v222, 1.442695
    %v224 = vpow.pop %v223
    %v225 = vsel %vm143, %v224, 0.0
    %226 = vadd.xlane.f32.xlu0 %v225
    %v227 = vpop.xlane.xlu0 %226
    %228 = vrot.lane.b32.xlu0 %v130, 64
    %v229 = vpop.permute.xlu0 %228
    %v232 = vsel %vm143, %v224, 0
    %234 = vmatprep.subr.mxu0 0.0
    %235 = vmatpush1.msra.mxu0 %v229
    %236 = vmatprep.subr.mxu0 0.0
    %237 = vmatpush1.msra.mxu0 0.0
    %238 = vmatprep.subr.mxu0 0.0
    %239 = vmatpush1.msra.mxu0 0.0
    %240 = vmatprep.subr.mxu0 0.0
    %241 = vmatpush1.msra.mxu0 0.0
    %242 = vmatprep.subr.mxu0 0.0
    %243 = vmatpush1.msra.mxu0 0.0
    %244 = vmatprep.subr.mxu0 0.0
    %245 = vmatpush1.msra.mxu0 0.0
    %246 = vmatprep.subr.mxu0 0.0
    %247 = vmatpush1.msra.mxu0 0.0
    %248 = vmatprep.subr.mxu0 0.0
    %249 = vmatpush1.msra.mxu0 0.0
    %250 = vmatprep.subr.mxu0 0.0
    %251 = vmatpush1.msra.mxu0 0.0
    %252 = vmatprep.subr.mxu0 0.0
    %253 = vmatpush1.msra.mxu0 0.0
    %254 = vmatprep.subr.mxu0 0.0
    %255 = vmatpush1.msra.mxu0 0.0
    %256 = vmatprep.subr.mxu0 0.0
    %257 = vmatpush1.msra.mxu0 0.0
    %258 = vmatprep.subr.mxu0 0.0
    %259 = vmatpush1.msra.mxu0 0.0
    %260 = vmatprep.subr.mxu0 0.0
    %261 = vmatpush1.msra.mxu0 0.0
    %262 = vmatprep.subr.mxu0 0.0
    %263 = vmatpush1.msra.mxu0 0.0
    %264 = vmatprep.subr.mxu0 0.0
    %265 = vmatpush1.msra.mxu0 0.0
    %266 = vmatprep.subr.mxu0 0.0
    %267 = vmatpush1.msra.mxu0 0.0
    %268 = vmatprep.subr.mxu0 0.0
    %269 = vmatpush1.msra.mxu0 0.0
    %270 = vmatprep.subr.mxu0 0.0
    %271 = vmatpush1.msra.mxu0 0.0
    %272 = vmatprep.subr.mxu0 0.0
    %273 = vmatpush1.msra.mxu0 0.0
    %274 = vmatprep.subr.mxu0 0.0
    %275 = vmatpush1.msra.mxu0 0.0
    %276 = vmatprep.subr.mxu0 0.0
    %277 = vmatpush1.msra.mxu0 0.0
    %278 = vmatprep.subr.mxu0 0.0
    %279 = vmatpush1.msra.mxu0 0.0
    %280 = vmatprep.subr.mxu0 0.0
    %281 = vmatpush1.msra.mxu0 0.0
    %282 = vmatprep.subr.mxu0 0.0
    %283 = vmatpush1.msra.mxu0 0.0
    %284 = vmatprep.subr.mxu0 0.0
    %285 = vmatpush1.msra.mxu0 0.0
    %286 = vmatprep.subr.mxu0 0.0
    %287 = vmatpush1.msra.mxu0 0.0
    %288 = vmatprep.subr.mxu0 0.0
    %289 = vmatpush1.msra.mxu0 0.0
    %290 = vmatprep.subr.mxu0 0.0
    %291 = vmatpush1.msra.mxu0 0.0
    %292 = vmatprep.subr.mxu0 0.0
    %293 = vmatpush1.msra.mxu0 0.0
    %294 = vmatprep.subr.mxu0 0.0
    %295 = vmatpush1.msra.mxu0 0.0
    %296 = vmatprep.subr.mxu0 0.0
    %297 = vmatpush1.msra.mxu0 0.0
    %298 = vmatprep.mubr.f32.mxu0 0.0
    %299 = vmatmul.mubr.f32.gmra.mrb[0].mxu0 %v232
    %v300 = vpop.f32.mrb[0].mxu0
    %v301 = vadd.f32 0.0, %v300
    %v302 = vpop.f32.mrb[0].mxu0
    %303 = vdwg.mxu0
    %v304 = vrcp.pop %v227
    %v305 = vmul.f32 %v301, %v304
    %306 = vrot.lane.b32.xlu0 %v138, 120
    %v307 = vpop.permute.xlu0 %306
    %308 = vrot.lane.b32.xlu0 %v130, 88
    %v309 = vpop.permute.xlu0 %308
    %v310 = vsel %vm143, %v307, 0
    %v312 = vsel %vm143, %v309, 0
    %314 = vmatprep.subr.mxu0 0.0
    %315 = vmatpush1.xpose.msra.mxu0 %v312
    %316 = vmatprep.subr.mxu0 0.0
    %317 = vmatpush1.xpose.msra.mxu0 0.0
    %318 = vmatprep.subr.mxu0 0.0
    %319 = vmatpush1.xpose.msra.mxu0 0.0
    %320 = vmatprep.subr.mxu0 0.0
    %321 = vmatpush1.xpose.msra.mxu0 0.0
    %322 = vmatprep.subr.mxu0 0.0
    %323 = vmatpush1.xpose.msra.mxu0 0.0
    %324 = vmatprep.subr.mxu0 0.0
    %325 = vmatpush1.xpose.msra.mxu0 0.0
    %326 = vmatprep.subr.mxu0 0.0
    %327 = vmatpush1.xpose.msra.mxu0 0.0
    %328 = vmatprep.subr.mxu0 0.0
    %329 = vmatpush1.xpose.msra.mxu0 0.0
    %330 = vmatprep.subr.mxu0 0.0
    %331 = vmatpush1.xpose.msra.mxu0 0.0
    %332 = vmatprep.subr.mxu0 0.0
    %333 = vmatpush1.xpose.msra.mxu0 0.0
    %334 = vmatprep.subr.mxu0 0.0
    %335 = vmatpush1.xpose.msra.mxu0 0.0
    %336 = vmatprep.subr.mxu0 0.0
    %337 = vmatpush1.xpose.msra.mxu0 0.0
    %338 = vmatprep.subr.mxu0 0.0
    %339 = vmatpush1.xpose.msra.mxu0 0.0
    %340 = vmatprep.subr.mxu0 0.0
    %341 = vmatpush1.xpose.msra.mxu0 0.0
    %342 = vmatprep.subr.mxu0 0.0
    %343 = vmatpush1.xpose.msra.mxu0 0.0
    %344 = vmatprep.subr.mxu0 0.0
    %345 = vmatpush1.xpose.msra.mxu0 0.0
    %346 = vmatprep.subr.mxu0 0.0
    %347 = vmatpush1.xpose.msra.mxu0 0.0
    %348 = vmatprep.subr.mxu0 0.0
    %349 = vmatpush1.xpose.msra.mxu0 0.0
    %350 = vmatprep.subr.mxu0 0.0
    %351 = vmatpush1.xpose.msra.mxu0 0.0
    %352 = vmatprep.subr.mxu0 0.0
    %353 = vmatpush1.xpose.msra.mxu0 0.0
    %354 = vmatprep.subr.mxu0 0.0
    %355 = vmatpush1.xpose.msra.mxu0 0.0
    %356 = vmatprep.subr.mxu0 0.0
    %357 = vmatpush1.xpose.msra.mxu0 0.0
    %358 = vmatprep.subr.mxu0 0.0
    %359 = vmatpush1.xpose.msra.mxu0 0.0
    %360 = vmatprep.subr.mxu0 0.0
    %361 = vmatpush1.xpose.msra.mxu0 0.0
    %362 = vmatprep.subr.mxu0 0.0
    %363 = vmatpush1.xpose.msra.mxu0 0.0
    %364 = vmatprep.subr.mxu0 0.0
    %365 = vmatpush1.xpose.msra.mxu0 0.0
    %366 = vmatprep.subr.mxu0 0.0
    %367 = vmatpush1.xpose.msra.mxu0 0.0
    %368 = vmatprep.subr.mxu0 0.0
    %369 = vmatpush1.xpose.msra.mxu0 0.0
    %370 = vmatprep.subr.mxu0 0.0
    %371 = vmatpush1.xpose.msra.mxu0 0.0
    %372 = vmatprep.subr.mxu0 0.0
    %373 = vmatpush1.xpose.msra.mxu0 0.0
    %374 = vmatprep.subr.mxu0 0.0
    %375 = vmatpush1.xpose.msra.mxu0 0.0
    %376 = vmatprep.subr.mxu0 0.0
    %377 = vmatpush1.xpose.msra.mxu0 0.0
    %378 = vmatprep.mubr.f32.mxu0 0.0
    %379 = vmatmul.mubr.f32.gmra.mrb[0].mxu0 %v310
    %v380 = vpop.f32.mrb[0].mxu0
    %v381 = vadd.f32 0.0, %v380
    %v382 = vpop.f32.mrb[0].mxu0
    %383 = vdwg.mxu0
    %v384 = vsel %vm143, %v381, -inf
    %385 = vmax.xlane.f32.xlu0 %v384
    %v386 = vpop.xlane.xlu0 %385
    %v387 = vsub.f32 %v381, %v386
    %v388 = vmul.f32 %v387, 1.442695
    %v389 = vpow.pop %v388
    %v390 = vsel %vm143, %v389, 0.0
    %391 = vadd.xlane.f32.xlu0 %v390
    %v392 = vpop.xlane.xlu0 %391
    %393 = vrot.lane.b32.xlu0 %v130, 56
    %v394 = vpop.permute.xlu0 %393
    %v397 = vsel %vm143, %v389, 0
    %399 = vmatprep.subr.mxu0 0.0
    %400 = vmatpush1.msra.mxu0 %v394
    %401 = vmatprep.subr.mxu0 0.0
    %402 = vmatpush1.msra.mxu0 0.0
    %403 = vmatprep.subr.mxu0 0.0
    %404 = vmatpush1.msra.mxu0 0.0
    %405 = vmatprep.subr.mxu0 0.0
    %406 = vmatpush1.msra.mxu0 0.0
    %407 = vmatprep.subr.mxu0 0.0
    %408 = vmatpush1.msra.mxu0 0.0
    %409 = vmatprep.subr.mxu0 0.0
    %410 = vmatpush1.msra.mxu0 0.0
    %411 = vmatprep.subr.mxu0 0.0
    %412 = vmatpush1.msra.mxu0 0.0
    %413 = vmatprep.subr.mxu0 0.0
    %414 = vmatpush1.msra.mxu0 0.0
    %415 = vmatprep.subr.mxu0 0.0
    %416 = vmatpush1.msra.mxu0 0.0
    %417 = vmatprep.subr.mxu0 0.0
    %418 = vmatpush1.msra.mxu0 0.0
    %419 = vmatprep.subr.mxu0 0.0
    %420 = vmatpush1.msra.mxu0 0.0
    %421 = vmatprep.subr.mxu0 0.0
    %422 = vmatpush1.msra.mxu0 0.0
    %423 = vmatprep.subr.mxu0 0.0
    %424 = vmatpush1.msra.mxu0 0.0
    %425 = vmatprep.subr.mxu0 0.0
    %426 = vmatpush1.msra.mxu0 0.0
    %427 = vmatprep.subr.mxu0 0.0
    %428 = vmatpush1.msra.mxu0 0.0
    %429 = vmatprep.subr.mxu0 0.0
    %430 = vmatpush1.msra.mxu0 0.0
    %431 = vmatprep.subr.mxu0 0.0
    %432 = vmatpush1.msra.mxu0 0.0
    %433 = vmatprep.subr.mxu0 0.0
    %434 = vmatpush1.msra.mxu0 0.0
    %435 = vmatprep.subr.mxu0 0.0
    %436 = vmatpush1.msra.mxu0 0.0
    %437 = vmatprep.subr.mxu0 0.0
    %438 = vmatpush1.msra.mxu0 0.0
    %439 = vmatprep.subr.mxu0 0.0
    %440 = vmatpush1.msra.mxu0 0.0
    %441 = vmatprep.subr.mxu0 0.0
    %442 = vmatpush1.msra.mxu0 0.0
    %443 = vmatprep.subr.mxu0 0.0
    %444 = vmatpush1.msra.mxu0 0.0
    %445 = vmatprep.subr.mxu0 0.0
    %446 = vmatpush1.msra.mxu0 0.0
    %447 = vmatprep.subr.mxu0 0.0
    %448 = vmatpush1.msra.mxu0 0.0
    %449 = vmatprep.subr.mxu0 0.0
    %450 = vmatpush1.msra.mxu0 0.0
    %451 = vmatprep.subr.mxu0 0.0
    %452 = vmatpush1.msra.mxu0 0.0
    %453 = vmatprep.subr.mxu0 0.0
    %454 = vmatpush1.msra.mxu0 0.0
    %455 = vmatprep.subr.mxu0 0.0
    %456 = vmatpush1.msra.mxu0 0.0
    %457 = vmatprep.subr.mxu0 0.0
    %458 = vmatpush1.msra.mxu0 0.0
    %459 = vmatprep.subr.mxu0 0.0
    %460 = vmatpush1.msra.mxu0 0.0
    %461 = vmatprep.subr.mxu0 0.0
    %462 = vmatpush1.msra.mxu0 0.0
    %463 = vmatprep.mubr.f32.mxu0 0.0
    %464 = vmatmul.mubr.f32.gmra.mrb[0].mxu0 %v397
    %v465 = vpop.f32.mrb[0].mxu0
    %v466 = vadd.f32 0.0, %v465
    %v467 = vpop.f32.mrb[0].mxu0
    %468 = vdwg.mxu0
    %v469 = vrcp.pop %v392
    %v470 = vmul.f32 %v466, %v469
    %471 = vrot.lane.b32.xlu0 %v138, 112
    %v472 = vpop.permute.xlu0 %471
    %473 = vrot.lane.b32.xlu0 %v130, 80
    %v474 = vpop.permute.xlu0 %473
    %v475 = vsel %vm143, %v472, 0
    %v477 = vsel %vm143, %v474, 0
    %479 = vmatprep.subr.mxu0 0.0
    %480 = vmatpush1.xpose.msra.mxu0 %v477
    %481 = vmatprep.subr.mxu0 0.0
    %482 = vmatpush1.xpose.msra.mxu0 0.0
    %483 = vmatprep.subr.mxu0 0.0
    %484 = vmatpush1.xpose.msra.mxu0 0.0
    %485 = vmatprep.subr.mxu0 0.0
    %486 = vmatpush1.xpose.msra.mxu0 0.0
    %487 = vmatprep.subr.mxu0 0.0
    %488 = vmatpush1.xpose.msra.mxu0 0.0
    %489 = vmatprep.subr.mxu0 0.0
    %490 = vmatpush1.xpose.msra.mxu0 0.0
    %491 = vmatprep.subr.mxu0 0.0
    %492 = vmatpush1.xpose.msra.mxu0 0.0
    %493 = vmatprep.subr.mxu0 0.0
    %494 = vmatpush1.xpose.msra.mxu0 0.0
    %495 = vmatprep.subr.mxu0 0.0
    %496 = vmatpush1.xpose.msra.mxu0 0.0
    %497 = vmatprep.subr.mxu0 0.0
    %498 = vmatpush1.xpose.msra.mxu0 0.0
    %499 = vmatprep.subr.mxu0 0.0
    %500 = vmatpush1.xpose.msra.mxu0 0.0
    %501 = vmatprep.subr.mxu0 0.0
    %502 = vmatpush1.xpose.msra.mxu0 0.0
    %503 = vmatprep.subr.mxu0 0.0
    %504 = vmatpush1.xpose.msra.mxu0 0.0
    %505 = vmatprep.subr.mxu0 0.0
    %506 = vmatpush1.xpose.msra.mxu0 0.0
    %507 = vmatprep.subr.mxu0 0.0
    %508 = vmatpush1.xpose.msra.mxu0 0.0
    %509 = vmatprep.subr.mxu0 0.0
    %510 = vmatpush1.xpose.msra.mxu0 0.0
    %511 = vmatprep.subr.mxu0 0.0
    %512 = vmatpush1.xpose.msra.mxu0 0.0
    %513 = vmatprep.subr.mxu0 0.0
    %514 = vmatpush1.xpose.msra.mxu0 0.0
    %515 = vmatprep.subr.mxu0 0.0
    %516 = vmatpush1.xpose.msra.mxu0 0.0
    %517 = vmatprep.subr.mxu0 0.0
    %518 = vmatpush1.xpose.msra.mxu0 0.0
    %519 = vmatprep.subr.mxu0 0.0
    %520 = vmatpush1.xpose.msra.mxu0 0.0
    %521 = vmatprep.subr.mxu0 0.0
    %522 = vmatpush1.xpose.msra.mxu0 0.0
    %523 = vmatprep.subr.mxu0 0.0
    %524 = vmatpush1.xpose.msra.mxu0 0.0
    %525 = vmatprep.subr.mxu0 0.0
    %526 = vmatpush1.xpose.msra.mxu0 0.0
    %527 = vmatprep.subr.mxu0 0.0
    %528 = vmatpush1.xpose.msra.mxu0 0.0
    %529 = vmatprep.subr.mxu0 0.0
    %530 = vmatpush1.xpose.msra.mxu0 0.0
    %531 = vmatprep.subr.mxu0 0.0
    %532 = vmatpush1.xpose.msra.mxu0 0.0
    %533 = vmatprep.subr.mxu0 0.0
    %534 = vmatpush1.xpose.msra.mxu0 0.0
    %535 = vmatprep.subr.mxu0 0.0
    %536 = vmatpush1.xpose.msra.mxu0 0.0
    %537 = vmatprep.subr.mxu0 0.0
    %538 = vmatpush1.xpose.msra.mxu0 0.0
    %539 = vmatprep.subr.mxu0 0.0
    %540 = vmatpush1.xpose.msra.mxu0 0.0
    %541 = vmatprep.subr.mxu0 0.0
    %542 = vmatpush1.xpose.msra.mxu0 0.0
    %543 = vmatprep.mubr.f32.mxu0 0.0
    %544 = vmatmul.mubr.f32.gmra.mrb[0].mxu0 %v475
    %v545 = vpop.f32.mrb[0].mxu0
    %v546 = vadd.f32 0.0, %v545
    %v547 = vpop.f32.mrb[0].mxu0
    %548 = vdwg.mxu0
    %v549 = vsel %vm143, %v546, -inf
    %550 = vmax.xlane.f32.xlu0 %v549
    %v551 = vpop.xlane.xlu0 %550
    %v552 = vsub.f32 %v546, %v551
    %v553 = vmul.f32 %v552, 1.442695
    %v554 = vpow.pop %v553
    %v555 = vsel %vm143, %v554, 0.0
    %556 = vadd.xlane.f32.xlu0 %v555
    %v557 = vpop.xlane.xlu0 %556
    %558 = vrot.lane.b32.xlu0 %v130, 48
    %v559 = vpop.permute.xlu0 %558
    %v562 = vsel %vm143, %v554, 0
    %564 = vmatprep.subr.mxu0 0.0
    %565 = vmatpush1.msra.mxu0 %v559
    %566 = vmatprep.subr.mxu0 0.0
    %567 = vmatpush1.msra.mxu0 0.0
    %568 = vmatprep.subr.mxu0 0.0
    %569 = vmatpush1.msra.mxu0 0.0
    %570 = vmatprep.subr.mxu0 0.0
    %571 = vmatpush1.msra.mxu0 0.0
    %572 = vmatprep.subr.mxu0 0.0
    %573 = vmatpush1.msra.mxu0 0.0
    %574 = vmatprep.subr.mxu0 0.0
    %575 = vmatpush1.msra.mxu0 0.0
    %576 = vmatprep.subr.mxu0 0.0
    %577 = vmatpush1.msra.mxu0 0.0
    %578 = vmatprep.subr.mxu0 0.0
    %579 = vmatpush1.msra.mxu0 0.0
    %580 = vmatprep.subr.mxu0 0.0
    %581 = vmatpush1.msra.mxu0 0.0
    %582 = vmatprep.subr.mxu0 0.0
    %583 = vmatpush1.msra.mxu0 0.0
    %584 = vmatprep.subr.mxu0 0.0
    %585 = vmatpush1.msra.mxu0 0.0
    %586 = vmatprep.subr.mxu0 0.0
    %587 = vmatpush1.msra.mxu0 0.0
    %588 = vmatprep.subr.mxu0 0.0
    %589 = vmatpush1.msra.mxu0 0.0
    %590 = vmatprep.subr.mxu0 0.0
    %591 = vmatpush1.msra.mxu0 0.0
    %592 = vmatprep.subr.mxu0 0.0
    %593 = vmatpush1.msra.mxu0 0.0
    %594 = vmatprep.subr.mxu0 0.0
    %595 = vmatpush1.msra.mxu0 0.0
    %596 = vmatprep.subr.mxu0 0.0
    %597 = vmatpush1.msra.mxu0 0.0
    %598 = vmatprep.subr.mxu0 0.0
    %599 = vmatpush1.msra.mxu0 0.0
    %600 = vmatprep.subr.mxu0 0.0
    %601 = vmatpush1.msra.mxu0 0.0
    %602 = vmatprep.subr.mxu0 0.0
    %603 = vmatpush1.msra.mxu0 0.0
    %604 = vmatprep.subr.mxu0 0.0
    %605 = vmatpush1.msra.mxu0 0.0
    %606 = vmatprep.subr.mxu0 0.0
    %607 = vmatpush1.msra.mxu0 0.0
    %608 = vmatprep.subr.mxu0 0.0
    %609 = vmatpush1.msra.mxu0 0.0
    %610 = vmatprep.subr.mxu0 0.0
    %611 = vmatpush1.msra.mxu0 0.0
    %612 = vmatprep.subr.mxu0 0.0
    %613 = vmatpush1.msra.mxu0 0.0
    %614 = vmatprep.subr.mxu0 0.0
    %615 = vmatpush1.msra.mxu0 0.0
    %616 = vmatprep.subr.mxu0 0.0
    %617 = vmatpush1.msra.mxu0 0.0
    %618 = vmatprep.subr.mxu0 0.0
    %619 = vmatpush1.msra.mxu0 0.0
    %620 = vmatprep.subr.mxu0 0.0
    %621 = vmatpush1.msra.mxu0 0.0
    %622 = vmatprep.subr.mxu0 0.0
    %623 = vmatpush1.msra.mxu0 0.0
    %624 = vmatprep.subr.mxu0 0.0
    %625 = vmatpush1.msra.mxu0 0.0
    %626 = vmatprep.subr.mxu0 0.0
    %627 = vmatpush1.msra.mxu0 0.0
    %628 = vmatprep.mubr.f32.mxu0 0.0
    %629 = vmatmul.mubr.f32.gmra.mrb[0].mxu0 %v562
    %v630 = vpop.f32.mrb[0].mxu0
    %v631 = vadd.f32 0.0, %v630
    %v632 = vpop.f32.mrb[0].mxu0
    %633 = vdwg.mxu0
    %v634 = vrcp.pop %v557
    %v635 = vmul.f32 %v631, %v634
    %636 = vrot.lane.b32.xlu0 %v138, 104
    %v637 = vpop.permute.xlu0 %636
    %638 = vrot.lane.b32.xlu0 %v130, 72
    %v639 = vpop.permute.xlu0 %638
    %v640 = vsel %vm143, %v637, 0
    %v642 = vsel %vm143, %v639, 0
    %644 = vmatprep.subr.mxu0 0.0
    %645 = vmatpush1.xpose.msra.mxu0 %v642
    %646 = vmatprep.subr.mxu0 0.0
    %647 = vmatpush1.xpose.msra.mxu0 0.0
    %648 = vmatprep.subr.mxu0 0.0
    %649 = vmatpush1.xpose.msra.mxu0 0.0
    %650 = vmatprep.subr.mxu0 0.0
    %651 = vmatpush1.xpose.msra.mxu0 0.0
    %652 = vmatprep.subr.mxu0 0.0
    %653 = vmatpush1.xpose.msra.mxu0 0.0
    %654 = vmatprep.subr.mxu0 0.0
    %655 = vmatpush1.xpose.msra.mxu0 0.0
    %656 = vmatprep.subr.mxu0 0.0
    %657 = vmatpush1.xpose.msra.mxu0 0.0
    %658 = vmatprep.subr.mxu0 0.0
    %659 = vmatpush1.xpose.msra.mxu0 0.0
    %660 = vmatprep.subr.mxu0 0.0
    %661 = vmatpush1.xpose.msra.mxu0 0.0
    %662 = vmatprep.subr.mxu0 0.0
    %663 = vmatpush1.xpose.msra.mxu0 0.0
    %664 = vmatprep.subr.mxu0 0.0
    %665 = vmatpush1.xpose.msra.mxu0 0.0
    %666 = vmatprep.subr.mxu0 0.0
    %667 = vmatpush1.xpose.msra.mxu0 0.0
    %668 = vmatprep.subr.mxu0 0.0
    %669 = vmatpush1.xpose.msra.mxu0 0.0
    %670 = vmatprep.subr.mxu0 0.0
    %671 = vmatpush1.xpose.msra.mxu0 0.0
    %672 = vmatprep.subr.mxu0 0.0
    %673 = vmatpush1.xpose.msra.mxu0 0.0
    %674 = vmatprep.subr.mxu0 0.0
    %675 = vmatpush1.xpose.msra.mxu0 0.0
    %676 = vmatprep.subr.mxu0 0.0
    %677 = vmatpush1.xpose.msra.mxu0 0.0
    %678 = vmatprep.subr.mxu0 0.0
    %679 = vmatpush1.xpose.msra.mxu0 0.0
    %680 = vmatprep.subr.mxu0 0.0
    %681 = vmatpush1.xpose.msra.mxu0 0.0
    %682 = vmatprep.subr.mxu0 0.0
    %683 = vmatpush1.xpose.msra.mxu0 0.0
    %684 = vmatprep.subr.mxu0 0.0
    %685 = vmatpush1.xpose.msra.mxu0 0.0
    %686 = vmatprep.subr.mxu0 0.0
    %687 = vmatpush1.xpose.msra.mxu0 0.0
    %688 = vmatprep.subr.mxu0 0.0
    %689 = vmatpush1.xpose.msra.mxu0 0.0
    %690 = vmatprep.subr.mxu0 0.0
    %691 = vmatpush1.xpose.msra.mxu0 0.0
    %692 = vmatprep.subr.mxu0 0.0
    %693 = vmatpush1.xpose.msra.mxu0 0.0
    %694 = vmatprep.subr.mxu0 0.0
    %695 = vmatpush1.xpose.msra.mxu0 0.0
    %696 = vmatprep.subr.mxu0 0.0
    %697 = vmatpush1.xpose.msra.mxu0 0.0
    %698 = vmatprep.subr.mxu0 0.0
    %699 = vmatpush1.xpose.msra.mxu0 0.0
    %700 = vmatprep.subr.mxu0 0.0
    %701 = vmatpush1.xpose.msra.mxu0 0.0
    %702 = vmatprep.subr.mxu0 0.0
    %703 = vmatpush1.xpose.msra.mxu0 0.0
    %704 = vmatprep.subr.mxu0 0.0
    %705 = vmatpush1.xpose.msra.mxu0 0.0
    %706 = vmatprep.subr.mxu0 0.0
    %707 = vmatpush1.xpose.msra.mxu0 0.0
    %708 = vmatprep.mubr.f32.mxu0 0.0
    %709 = vmatmul.mubr.f32.gmra.mrb[0].mxu0 %v640
    %v710 = vpop.f32.mrb[0].mxu0
    %v711 = vadd.f32 0.0, %v710
    %v712 = vpop.f32.mrb[0].mxu0
    %713 = vdwg.mxu0
    %v714 = vsel %vm143, %v711, -inf
    %715 = vmax.xlane.f32.xlu0 %v714
    %v716 = vpop.xlane.xlu0 %715
    %v717 = vsub.f32 %v711, %v716
    %v718 = vmul.f32 %v717, 1.442695
    %v719 = vpow.pop %v718
    %v720 = vsel %vm143, %v719, 0.0
    %721 = vadd.xlane.f32.xlu0 %v720
    %v722 = vpop.xlane.xlu0 %721
    %723 = vrot.lane.b32.xlu0 %v130, 40
    %v724 = vpop.permute.xlu0 %723
    %v727 = vsel %vm143, %v719, 0
    %729 = vmatprep.subr.mxu0 0.0
    %730 = vmatpush1.msra.mxu0 %v724
    %731 = vmatprep.subr.mxu0 0.0
    %732 = vmatpush1.msra.mxu0 0.0
    %733 = vmatprep.subr.mxu0 0.0
    %734 = vmatpush1.msra.mxu0 0.0
    %735 = vmatprep.subr.mxu0 0.0
    %736 = vmatpush1.msra.mxu0 0.0
    %737 = vmatprep.subr.mxu0 0.0
    %738 = vmatpush1.msra.mxu0 0.0
    %739 = vmatprep.subr.mxu0 0.0
    %740 = vmatpush1.msra.mxu0 0.0
    %741 = vmatprep.subr.mxu0 0.0
    %742 = vmatpush1.msra.mxu0 0.0
    %743 = vmatprep.subr.mxu0 0.0
    %744 = vmatpush1.msra.mxu0 0.0
    %745 = vmatprep.subr.mxu0 0.0
    %746 = vmatpush1.msra.mxu0 0.0
    %747 = vmatprep.subr.mxu0 0.0
    %748 = vmatpush1.msra.mxu0 0.0
    %749 = vmatprep.subr.mxu0 0.0
    %750 = vmatpush1.msra.mxu0 0.0
    %751 = vmatprep.subr.mxu0 0.0
    %752 = vmatpush1.msra.mxu0 0.0
    %753 = vmatprep.subr.mxu0 0.0
    %754 = vmatpush1.msra.mxu0 0.0
    %755 = vmatprep.subr.mxu0 0.0
    %756 = vmatpush1.msra.mxu0 0.0
    %757 = vmatprep.subr.mxu0 0.0
    %758 = vmatpush1.msra.mxu0 0.0
    %759 = vmatprep.subr.mxu0 0.0
    %760 = vmatpush1.msra.mxu0 0.0
    %761 = vmatprep.subr.mxu0 0.0
    %762 = vmatpush1.msra.mxu0 0.0
    %763 = vmatprep.subr.mxu0 0.0
    %764 = vmatpush1.msra.mxu0 0.0
    %765 = vmatprep.subr.mxu0 0.0
    %766 = vmatpush1.msra.mxu0 0.0
    %767 = vmatprep.subr.mxu0 0.0
    %768 = vmatpush1.msra.mxu0 0.0
    %769 = vmatprep.subr.mxu0 0.0
    %770 = vmatpush1.msra.mxu0 0.0
    %771 = vmatprep.subr.mxu0 0.0
    %772 = vmatpush1.msra.mxu0 0.0
    %773 = vmatprep.subr.mxu0 0.0
    %774 = vmatpush1.msra.mxu0 0.0
    %775 = vmatprep.subr.mxu0 0.0
    %776 = vmatpush1.msra.mxu0 0.0
    %777 = vmatprep.subr.mxu0 0.0
    %778 = vmatpush1.msra.mxu0 0.0
    %779 = vmatprep.subr.mxu0 0.0
    %780 = vmatpush1.msra.mxu0 0.0
    %781 = vmatprep.subr.mxu0 0.0
    %782 = vmatpush1.msra.mxu0 0.0
    %783 = vmatprep.subr.mxu0 0.0
    %784 = vmatpush1.msra.mxu0 0.0
    %785 = vmatprep.subr.mxu0 0.0
    %786 = vmatpush1.msra.mxu0 0.0
    %787 = vmatprep.subr.mxu0 0.0
    %788 = vmatpush1.msra.mxu0 0.0
    %789 = vmatprep.subr.mxu0 0.0
    %790 = vmatpush1.msra.mxu0 0.0
    %791 = vmatprep.subr.mxu0 0.0
    %792 = vmatpush1.msra.mxu0 0.0
    %793 = vmatprep.mubr.f32.mxu0 0.0
    %794 = vmatmul.mubr.f32.gmra.mrb[0].mxu0 %v727
    %v795 = vpop.f32.mrb[0].mxu0
    %v796 = vadd.f32 0.0, %v795
    %v797 = vpop.f32.mrb[0].mxu0
    %798 = vdwg.mxu0
    %v799 = vrcp.pop %v722
    %v800 = vmul.f32 %v796, %v799
    %802 = vrot.lane.b32.xlu0 %v470, 8
    %v803 = vpop.permute.xlu0 %802
    %806 = vrot.lane.b32.xlu0 %v635, 16
    %v807 = vpop.permute.xlu0 %806
    %810 = vrot.lane.b32.xlu0 %v800, 24
    %v811 = vpop.permute.xlu0 %810
    %v813 = vsel %vm143, %v305, %v803
    %vm814 = vcmask 130048
    %v815 = vsel %vm814, %v813, %v807
    %vm816 = vcmask 195584
    %v817 = vsel %vm816, %v815, %v811
    %v818 = vtanh.pop %v817
    %819 = vst.msk [vmem:[#allocation7] sm:$0xff] %vm56, %v818
    %821 = vrot.lane.b32.xlu0 %v135, 96
    %v822 = vpop.permute.xlu0 %821
    %v824 = vsel %vm143, %v139, 0
    %v826 = vsel %vm143, %v822, 0
    %828 = vmatprep.subr.mxu0 0.0
    %829 = vmatpush1.xpose.msra.mxu0 %v826
    %830 = vmatprep.subr.mxu0 0.0
    %831 = vmatpush1.xpose.msra.mxu0 0.0
    %832 = vmatprep.subr.mxu0 0.0
    %833 = vmatpush1.xpose.msra.mxu0 0.0
    %834 = vmatprep.subr.mxu0 0.0
    %835 = vmatpush1.xpose.msra.mxu0 0.0
    %836 = vmatprep.subr.mxu0 0.0
    %837 = vmatpush1.xpose.msra.mxu0 0.0
    %838 = vmatprep.subr.mxu0 0.0
    %839 = vmatpush1.xpose.msra.mxu0 0.0
    %840 = vmatprep.subr.mxu0 0.0
    %841 = vmatpush1.xpose.msra.mxu0 0.0
    %842 = vmatprep.subr.mxu0 0.0
    %843 = vmatpush1.xpose.msra.mxu0 0.0
    %844 = vmatprep.subr.mxu0 0.0
    %845 = vmatpush1.xpose.msra.mxu0 0.0
    %846 = vmatprep.subr.mxu0 0.0
    %847 = vmatpush1.xpose.msra.mxu0 0.0
    %848 = vmatprep.subr.mxu0 0.0
    %849 = vmatpush1.xpose.msra.mxu0 0.0
    %850 = vmatprep.subr.mxu0 0.0
    %851 = vmatpush1.xpose.msra.mxu0 0.0
    %852 = vmatprep.subr.mxu0 0.0
    %853 = vmatpush1.xpose.msra.mxu0 0.0
    %854 = vmatprep.subr.mxu0 0.0
    %855 = vmatpush1.xpose.msra.mxu0 0.0
    %856 = vmatprep.subr.mxu0 0.0
    %857 = vmatpush1.xpose.msra.mxu0 0.0
    %858 = vmatprep.subr.mxu0 0.0
    %859 = vmatpush1.xpose.msra.mxu0 0.0
    %860 = vmatprep.subr.mxu0 0.0
    %861 = vmatpush1.xpose.msra.mxu0 0.0
    %862 = vmatprep.subr.mxu0 0.0
    %863 = vmatpush1.xpose.msra.mxu0 0.0
    %864 = vmatprep.subr.mxu0 0.0
    %865 = vmatpush1.xpose.msra.mxu0 0.0
    %866 = vmatprep.subr.mxu0 0.0
    %867 = vmatpush1.xpose.msra.mxu0 0.0
    %868 = vmatprep.subr.mxu0 0.0
    %869 = vmatpush1.xpose.msra.mxu0 0.0
    %870 = vmatprep.subr.mxu0 0.0
    %871 = vmatpush1.xpose.msra.mxu0 0.0
    %872 = vmatprep.subr.mxu0 0.0
    %873 = vmatpush1.xpose.msra.mxu0 0.0
    %874 = vmatprep.subr.mxu0 0.0
    %875 = vmatpush1.xpose.msra.mxu0 0.0
    %876 = vmatprep.subr.mxu0 0.0
    %877 = vmatpush1.xpose.msra.mxu0 0.0
    %878 = vmatprep.subr.mxu0 0.0
    %879 = vmatpush1.xpose.msra.mxu0 0.0
    %880 = vmatprep.subr.mxu0 0.0
    %881 = vmatpush1.xpose.msra.mxu0 0.0
    %882 = vmatprep.subr.mxu0 0.0
    %883 = vmatpush1.xpose.msra.mxu0 0.0
    %884 = vmatprep.subr.mxu0 0.0
    %885 = vmatpush1.xpose.msra.mxu0 0.0
    %886 = vmatprep.subr.mxu0 0.0
    %887 = vmatpush1.xpose.msra.mxu0 0.0
    %888 = vmatprep.subr.mxu0 0.0
    %889 = vmatpush1.xpose.msra.mxu0 0.0
    %890 = vmatprep.subr.mxu0 0.0
    %891 = vmatpush1.xpose.msra.mxu0 0.0
    %892 = vmatprep.mubr.f32.mxu0 0.0
    %893 = vmatmul.mubr.f32.gmra.mrb[0].mxu0 %v824
    %v894 = vpop.f32.mrb[0].mxu0
    %v895 = vadd.f32 0.0, %v894
    %v896 = vpop.f32.mrb[0].mxu0
    %897 = vdwg.mxu0
    %v898 = vsel %vm143, %v895, -inf
    %899 = vmax.xlane.f32.xlu0 %v898
    %v900 = vpop.xlane.xlu0 %899
    %v901 = vsub.f32 %v895, %v900
    %v902 = vmul.f32 %v901, 1.442695
    %v903 = vpow.pop %v902
    %v904 = vsel %vm143, %v903, 0.0
    %905 = vadd.xlane.f32.xlu0 %v904
    %v906 = vpop.xlane.xlu0 %905
    %907 = vrot.lane.b32.xlu0 %v135, 64
    %v908 = vpop.permute.xlu0 %907
    %v911 = vsel %vm143, %v903, 0
    %913 = vmatprep.subr.mxu0 0.0
    %914 = vmatpush1.msra.mxu0 %v908
    %915 = vmatprep.subr.mxu0 0.0
    %916 = vmatpush1.msra.mxu0 0.0
    %917 = vmatprep.subr.mxu0 0.0
    %918 = vmatpush1.msra.mxu0 0.0
    %919 = vmatprep.subr.mxu0 0.0
    %920 = vmatpush1.msra.mxu0 0.0
    %921 = vmatprep.subr.mxu0 0.0
    %922 = vmatpush1.msra.mxu0 0.0
    %923 = vmatprep.subr.mxu0 0.0
    %924 = vmatpush1.msra.mxu0 0.0
    %925 = vmatprep.subr.mxu0 0.0
    %926 = vmatpush1.msra.mxu0 0.0
    %927 = vmatprep.subr.mxu0 0.0
    %928 = vmatpush1.msra.mxu0 0.0
    %929 = vmatprep.subr.mxu0 0.0
    %930 = vmatpush1.msra.mxu0 0.0
    %931 = vmatprep.subr.mxu0 0.0
    %932 = vmatpush1.msra.mxu0 0.0
    %933 = vmatprep.subr.mxu0 0.0
    %934 = vmatpush1.msra.mxu0 0.0
    %935 = vmatprep.subr.mxu0 0.0
    %936 = vmatpush1.msra.mxu0 0.0
    %937 = vmatprep.subr.mxu0 0.0
    %938 = vmatpush1.msra.mxu0 0.0
    %939 = vmatprep.subr.mxu0 0.0
    %940 = vmatpush1.msra.mxu0 0.0
    %941 = vmatprep.subr.mxu0 0.0
    %942 = vmatpush1.msra.mxu0 0.0
    %943 = vmatprep.subr.mxu0 0.0
    %944 = vmatpush1.msra.mxu0 0.0
    %945 = vmatprep.subr.mxu0 0.0
    %946 = vmatpush1.msra.mxu0 0.0
    %947 = vmatprep.subr.mxu0 0.0
    %948 = vmatpush1.msra.mxu0 0.0
    %949 = vmatprep.subr.mxu0 0.0
    %950 = vmatpush1.msra.mxu0 0.0
    %951 = vmatprep.subr.mxu0 0.0
    %952 = vmatpush1.msra.mxu0 0.0
    %953 = vmatprep.subr.mxu0 0.0
    %954 = vmatpush1.msra.mxu0 0.0
    %955 = vmatprep.subr.mxu0 0.0
    %956 = vmatpush1.msra.mxu0 0.0
    %957 = vmatprep.subr.mxu0 0.0
    %958 = vmatpush1.msra.mxu0 0.0
    %959 = vmatprep.subr.mxu0 0.0
    %960 = vmatpush1.msra.mxu0 0.0
    %961 = vmatprep.subr.mxu0 0.0
    %962 = vmatpush1.msra.mxu0 0.0
    %963 = vmatprep.subr.mxu0 0.0
    %964 = vmatpush1.msra.mxu0 0.0
    %965 = vmatprep.subr.mxu0 0.0
    %966 = vmatpush1.msra.mxu0 0.0
    %967 = vmatprep.subr.mxu0 0.0
    %968 = vmatpush1.msra.mxu0 0.0
    %969 = vmatprep.subr.mxu0 0.0
    %970 = vmatpush1.msra.mxu0 0.0
    %971 = vmatprep.subr.mxu0 0.0
    %972 = vmatpush1.msra.mxu0 0.0
    %973 = vmatprep.subr.mxu0 0.0
    %974 = vmatpush1.msra.mxu0 0.0
    %975 = vmatprep.subr.mxu0 0.0
    %976 = vmatpush1.msra.mxu0 0.0
    %977 = vmatprep.mubr.f32.mxu0 0.0
    %978 = vmatmul.mubr.f32.gmra.mrb[0].mxu0 %v911
    %v979 = vpop.f32.mrb[0].mxu0
    %v980 = vadd.f32 0.0, %v979
    %v981 = vpop.f32.mrb[0].mxu0
    %982 = vdwg.mxu0
    %v983 = vrcp.pop %v906
    %v984 = vmul.f32 %v980, %v983
    %985 = vrot.lane.b32.xlu0 %v139, 120
    %v986 = vpop.permute.xlu0 %985
    %987 = vrot.lane.b32.xlu0 %v135, 88
    %v988 = vpop.permute.xlu0 %987
    %v989 = vsel %vm143, %v986, 0
    %v991 = vsel %vm143, %v988, 0
    %993 = vmatprep.subr.mxu0 0.0
    %994 = vmatpush1.xpose.msra.mxu0 %v991
    %995 = vmatprep.subr.mxu0 0.0
    %996 = vmatpush1.xpose.msra.mxu0 0.0
    %997 = vmatprep.subr.mxu0 0.0
    %998 = vmatpush1.xpose.msra.mxu0 0.0
    %999 = vmatprep.subr.mxu0 0.0
    %1000 = vmatpush1.xpose.msra.mxu0 0.0
    %1001 = vmatprep.subr.mxu0 0.0
    %1002 = vmatpush1.xpose.msra.mxu0 0.0
    %1003 = vmatprep.subr.mxu0 0.0
    %1004 = vmatpush1.xpose.msra.mxu0 0.0
    %1005 = vmatprep.subr.mxu0 0.0
    %1006 = vmatpush1.xpose.msra.mxu0 0.0
    %1007 = vmatprep.subr.mxu0 0.0
    %1008 = vmatpush1.xpose.msra.mxu0 0.0
    %1009 = vmatprep.subr.mxu0 0.0
    %1010 = vmatpush1.xpose.msra.mxu0 0.0
    %1011 = vmatprep.subr.mxu0 0.0
    %1012 = vmatpush1.xpose.msra.mxu0 0.0
    %1013 = vmatprep.subr.mxu0 0.0
    %1014 = vmatpush1.xpose.msra.mxu0 0.0
    %1015 = vmatprep.subr.mxu0 0.0
    %1016 = vmatpush1.xpose.msra.mxu0 0.0
    %1017 = vmatprep.subr.mxu0 0.0
    %1018 = vmatpush1.xpose.msra.mxu0 0.0
    %1019 = vmatprep.subr.mxu0 0.0
    %1020 = vmatpush1.xpose.msra.mxu0 0.0
    %1021 = vmatprep.subr.mxu0 0.0
    %1022 = vmatpush1.xpose.msra.mxu0 0.0
    %1023 = vmatprep.subr.mxu0 0.0
    %1024 = vmatpush1.xpose.msra.mxu0 0.0
    %1025 = vmatprep.subr.mxu0 0.0
    %1026 = vmatpush1.xpose.msra.mxu0 0.0
    %1027 = vmatprep.subr.mxu0 0.0
    %1028 = vmatpush1.xpose.msra.mxu0 0.0
    %1029 = vmatprep.subr.mxu0 0.0
    %1030 = vmatpush1.xpose.msra.mxu0 0.0
    %1031 = vmatprep.subr.mxu0 0.0
    %1032 = vmatpush1.xpose.msra.mxu0 0.0
    %1033 = vmatprep.subr.mxu0 0.0
    %1034 = vmatpush1.xpose.msra.mxu0 0.0
    %1035 = vmatprep.subr.mxu0 0.0
    %1036 = vmatpush1.xpose.msra.mxu0 0.0
    %1037 = vmatprep.subr.mxu0 0.0
    %1038 = vmatpush1.xpose.msra.mxu0 0.0
    %1039 = vmatprep.subr.mxu0 0.0
    %1040 = vmatpush1.xpose.msra.mxu0 0.0
    %1041 = vmatprep.subr.mxu0 0.0
    %1042 = vmatpush1.xpose.msra.mxu0 0.0
    %1043 = vmatprep.subr.mxu0 0.0
    %1044 = vmatpush1.xpose.msra.mxu0 0.0
    %1045 = vmatprep.subr.mxu0 0.0
    %1046 = vmatpush1.xpose.msra.mxu0 0.0
    %1047 = vmatprep.subr.mxu0 0.0
    %1048 = vmatpush1.xpose.msra.mxu0 0.0
    %1049 = vmatprep.subr.mxu0 0.0
    %1050 = vmatpush1.xpose.msra.mxu0 0.0
    %1051 = vmatprep.subr.mxu0 0.0
    %1052 = vmatpush1.xpose.msra.mxu0 0.0
    %1053 = vmatprep.subr.mxu0 0.0
    %1054 = vmatpush1.xpose.msra.mxu0 0.0
    %1055 = vmatprep.subr.mxu0 0.0
    %1056 = vmatpush1.xpose.msra.mxu0 0.0
    %1057 = vmatprep.mubr.f32.mxu0 0.0
    %1058 = vmatmul.mubr.f32.gmra.mrb[0].mxu0 %v989
    %v1059 = vpop.f32.mrb[0].mxu0
    %v1060 = vadd.f32 0.0, %v1059
    %v1061 = vpop.f32.mrb[0].mxu0
    %1062 = vdwg.mxu0
    %v1063 = vsel %vm143, %v1060, -inf
    %1064 = vmax.xlane.f32.xlu0 %v1063
    %v1065 = vpop.xlane.xlu0 %1064
    %v1066 = vsub.f32 %v1060, %v1065
    %v1067 = vmul.f32 %v1066, 1.442695
    %v1068 = vpow.pop %v1067
    %v1069 = vsel %vm143, %v1068, 0.0
    %1070 = vadd.xlane.f32.xlu0 %v1069
    %v1071 = vpop.xlane.xlu0 %1070
    %1072 = vrot.lane.b32.xlu0 %v135, 56
    %v1073 = vpop.permute.xlu0 %1072
    %v1076 = vsel %vm143, %v1068, 0
    %1078 = vmatprep.subr.mxu0 0.0
    %1079 = vmatpush1.msra.mxu0 %v1073
    %1080 = vmatprep.subr.mxu0 0.0
    %1081 = vmatpush1.msra.mxu0 0.0
    %1082 = vmatprep.subr.mxu0 0.0
    %1083 = vmatpush1.msra.mxu0 0.0
    %1084 = vmatprep.subr.mxu0 0.0
    %1085 = vmatpush1.msra.mxu0 0.0
    %1086 = vmatprep.subr.mxu0 0.0
    %1087 = vmatpush1.msra.mxu0 0.0
    %1088 = vmatprep.subr.mxu0 0.0
    %1089 = vmatpush1.msra.mxu0 0.0
    %1090 = vmatprep.subr.mxu0 0.0
    %1091 = vmatpush1.msra.mxu0 0.0
    %1092 = vmatprep.subr.mxu0 0.0
    %1093 = vmatpush1.msra.mxu0 0.0
    %1094 = vmatprep.subr.mxu0 0.0
    %1095 = vmatpush1.msra.mxu0 0.0
    %1096 = vmatprep.subr.mxu0 0.0
    %1097 = vmatpush1.msra.mxu0 0.0
    %1098 = vmatprep.subr.mxu0 0.0
    %1099 = vmatpush1.msra.mxu0 0.0
    %1100 = vmatprep.subr.mxu0 0.0
    %1101 = vmatpush1.msra.mxu0 0.0
    %1102 = vmatprep.subr.mxu0 0.0
    %1103 = vmatpush1.msra.mxu0 0.0
    %1104 = vmatprep.subr.mxu0 0.0
    %1105 = vmatpush1.msra.mxu0 0.0
    %1106 = vmatprep.subr.mxu0 0.0
    %1107 = vmatpush1.msra.mxu0 0.0
    %1108 = vmatprep.subr.mxu0 0.0
    %1109 = vmatpush1.msra.mxu0 0.0
    %1110 = vmatprep.subr.mxu0 0.0
    %1111 = vmatpush1.msra.mxu0 0.0
    %1112 = vmatprep.subr.mxu0 0.0
    %1113 = vmatpush1.msra.mxu0 0.0
    %1114 = vmatprep.subr.mxu0 0.0
    %1115 = vmatpush1.msra.mxu0 0.0
    %1116 = vmatprep.subr.mxu0 0.0
    %1117 = vmatpush1.msra.mxu0 0.0
    %1118 = vmatprep.subr.mxu0 0.0
    %1119 = vmatpush1.msra.mxu0 0.0
    %1120 = vmatprep.subr.mxu0 0.0
    %1121 = vmatpush1.msra.mxu0 0.0
    %1122 = vmatprep.subr.mxu0 0.0
    %1123 = vmatpush1.msra.mxu0 0.0
    %1124 = vmatprep.subr.mxu0 0.0
    %1125 = vmatpush1.msra.mxu0 0.0
    %1126 = vmatprep.subr.mxu0 0.0
    %1127 = vmatpush1.msra.mxu0 0.0
    %1128 = vmatprep.subr.mxu0 0.0
    %1129 = vmatpush1.msra.mxu0 0.0
    %1130 = vmatprep.subr.mxu0 0.0
    %1131 = vmatpush1.msra.mxu0 0.0
    %1132 = vmatprep.subr.mxu0 0.0
    %1133 = vmatpush1.msra.mxu0 0.0
    %1134 = vmatprep.subr.mxu0 0.0
    %1135 = vmatpush1.msra.mxu0 0.0
    %1136 = vmatprep.subr.mxu0 0.0
    %1137 = vmatpush1.msra.mxu0 0.0
    %1138 = vmatprep.subr.mxu0 0.0
    %1139 = vmatpush1.msra.mxu0 0.0
    %1140 = vmatprep.subr.mxu0 0.0
    %1141 = vmatpush1.msra.mxu0 0.0
    %1142 = vmatprep.mubr.f32.mxu0 0.0
    %1143 = vmatmul.mubr.f32.gmra.mrb[0].mxu0 %v1076
    %v1144 = vpop.f32.mrb[0].mxu0
    %v1145 = vadd.f32 0.0, %v1144
    %v1146 = vpop.f32.mrb[0].mxu0
    %1147 = vdwg.mxu0
    %v1148 = vrcp.pop %v1071
    %v1149 = vmul.f32 %v1145, %v1148
    %1150 = vrot.lane.b32.xlu0 %v139, 112
    %v1151 = vpop.permute.xlu0 %1150
    %1152 = vrot.lane.b32.xlu0 %v135, 80
    %v1153 = vpop.permute.xlu0 %1152
    %v1154 = vsel %vm143, %v1151, 0
    %v1156 = vsel %vm143, %v1153, 0
    %1158 = vmatprep.subr.mxu0 0.0
    %1159 = vmatpush1.xpose.msra.mxu0 %v1156
    %1160 = vmatprep.subr.mxu0 0.0
    %1161 = vmatpush1.xpose.msra.mxu0 0.0
    %1162 = vmatprep.subr.mxu0 0.0
    %1163 = vmatpush1.xpose.msra.mxu0 0.0
    %1164 = vmatprep.subr.mxu0 0.0
    %1165 = vmatpush1.xpose.msra.mxu0 0.0
    %1166 = vmatprep.subr.mxu0 0.0
    %1167 = vmatpush1.xpose.msra.mxu0 0.0
    %1168 = vmatprep.subr.mxu0 0.0
    %1169 = vmatpush1.xpose.msra.mxu0 0.0
    %1170 = vmatprep.subr.mxu0 0.0
    %1171 = vmatpush1.xpose.msra.mxu0 0.0
    %1172 = vmatprep.subr.mxu0 0.0
    %1173 = vmatpush1.xpose.msra.mxu0 0.0
    %1174 = vmatprep.subr.mxu0 0.0
    %1175 = vmatpush1.xpose.msra.mxu0 0.0
    %1176 = vmatprep.subr.mxu0 0.0
    %1177 = vmatpush1.xpose.msra.mxu0 0.0
    %1178 = vmatprep.subr.mxu0 0.0
    %1179 = vmatpush1.xpose.msra.mxu0 0.0
    %1180 = vmatprep.subr.mxu0 0.0
    %1181 = vmatpush1.xpose.msra.mxu0 0.0
    %1182 = vmatprep.subr.mxu0 0.0
    %1183 = vmatpush1.xpose.msra.mxu0 0.0
    %1184 = vmatprep.subr.mxu0 0.0
    %1185 = vmatpush1.xpose.msra.mxu0 0.0
    %1186 = vmatprep.subr.mxu0 0.0
    %1187 = vmatpush1.xpose.msra.mxu0 0.0
    %1188 = vmatprep.subr.mxu0 0.0
    %1189 = vmatpush1.xpose.msra.mxu0 0.0
    %1190 = vmatprep.subr.mxu0 0.0
    %1191 = vmatpush1.xpose.msra.mxu0 0.0
    %1192 = vmatprep.subr.mxu0 0.0
    %1193 = vmatpush1.xpose.msra.mxu0 0.0
    %1194 = vmatprep.subr.mxu0 0.0
    %1195 = vmatpush1.xpose.msra.mxu0 0.0
    %1196 = vmatprep.subr.mxu0 0.0
    %1197 = vmatpush1.xpose.msra.mxu0 0.0
    %1198 = vmatprep.subr.mxu0 0.0
    %1199 = vmatpush1.xpose.msra.mxu0 0.0
    %1200 = vmatprep.subr.mxu0 0.0
    %1201 = vmatpush1.xpose.msra.mxu0 0.0
    %1202 = vmatprep.subr.mxu0 0.0
    %1203 = vmatpush1.xpose.msra.mxu0 0.0
    %1204 = vmatprep.subr.mxu0 0.0
    %1205 = vmatpush1.xpose.msra.mxu0 0.0
    %1206 = vmatprep.subr.mxu0 0.0
    %1207 = vmatpush1.xpose.msra.mxu0 0.0
    %1208 = vmatprep.subr.mxu0 0.0
    %1209 = vmatpush1.xpose.msra.mxu0 0.0
    %1210 = vmatprep.subr.mxu0 0.0
    %1211 = vmatpush1.xpose.msra.mxu0 0.0
    %1212 = vmatprep.subr.mxu0 0.0
    %1213 = vmatpush1.xpose.msra.mxu0 0.0
    %1214 = vmatprep.subr.mxu0 0.0
    %1215 = vmatpush1.xpose.msra.mxu0 0.0
    %1216 = vmatprep.subr.mxu0 0.0
    %1217 = vmatpush1.xpose.msra.mxu0 0.0
    %1218 = vmatprep.subr.mxu0 0.0
    %1219 = vmatpush1.xpose.msra.mxu0 0.0
    %1220 = vmatprep.subr.mxu0 0.0
    %1221 = vmatpush1.xpose.msra.mxu0 0.0
    %1222 = vmatprep.mubr.f32.mxu0 0.0
    %1223 = vmatmul.mubr.f32.gmra.mrb[0].mxu0 %v1154
    %v1224 = vpop.f32.mrb[0].mxu0
    %v1225 = vadd.f32 0.0, %v1224
    %v1226 = vpop.f32.mrb[0].mxu0
    %1227 = vdwg.mxu0
    %v1228 = vsel %vm143, %v1225, -inf
    %1229 = vmax.xlane.f32.xlu0 %v1228
    %v1230 = vpop.xlane.xlu0 %1229
    %v1231 = vsub.f32 %v1225, %v1230
    %v1232 = vmul.f32 %v1231, 1.442695
    %v1233 = vpow.pop %v1232
    %v1234 = vsel %vm143, %v1233, 0.0
    %1235 = vadd.xlane.f32.xlu0 %v1234
    %v1236 = vpop.xlane.xlu0 %1235
    %1237 = vrot.lane.b32.xlu0 %v135, 48
    %v1238 = vpop.permute.xlu0 %1237
    %v1241 = vsel %vm143, %v1233, 0
    %1243 = vmatprep.subr.mxu0 0.0
    %1244 = vmatpush1.msra.mxu0 %v1238
    %1245 = vmatprep.subr.mxu0 0.0
    %1246 = vmatpush1.msra.mxu0 0.0
    %1247 = vmatprep.subr.mxu0 0.0
    %1248 = vmatpush1.msra.mxu0 0.0
    %1249 = vmatprep.subr.mxu0 0.0
    %1250 = vmatpush1.msra.mxu0 0.0
    %1251 = vmatprep.subr.mxu0 0.0
    %1252 = vmatpush1.msra.mxu0 0.0
    %1253 = vmatprep.subr.mxu0 0.0
    %1254 = vmatpush1.msra.mxu0 0.0
    %1255 = vmatprep.subr.mxu0 0.0
    %1256 = vmatpush1.msra.mxu0 0.0
    %1257 = vmatprep.subr.mxu0 0.0
    %1258 = vmatpush1.msra.mxu0 0.0
    %1259 = vmatprep.subr.mxu0 0.0
    %1260 = vmatpush1.msra.mxu0 0.0
    %1261 = vmatprep.subr.mxu0 0.0
    %1262 = vmatpush1.msra.mxu0 0.0
    %1263 = vmatprep.subr.mxu0 0.0
    %1264 = vmatpush1.msra.mxu0 0.0
    %1265 = vmatprep.subr.mxu0 0.0
    %1266 = vmatpush1.msra.mxu0 0.0
    %1267 = vmatprep.subr.mxu0 0.0
    %1268 = vmatpush1.msra.mxu0 0.0
    %1269 = vmatprep.subr.mxu0 0.0
    %1270 = vmatpush1.msra.mxu0 0.0
    %1271 = vmatprep.subr.mxu0 0.0
    %1272 = vmatpush1.msra.mxu0 0.0
    %1273 = vmatprep.subr.mxu0 0.0
    %1274 = vmatpush1.msra.mxu0 0.0
    %1275 = vmatprep.subr.mxu0 0.0
    %1276 = vmatpush1.msra.mxu0 0.0
    %1277 = vmatprep.subr.mxu0 0.0
    %1278 = vmatpush1.msra.mxu0 0.0
    %1279 = vmatprep.subr.mxu0 0.0
    %1280 = vmatpush1.msra.mxu0 0.0
    %1281 = vmatprep.subr.mxu0 0.0
    %1282 = vmatpush1.msra.mxu0 0.0
    %1283 = vmatprep.subr.mxu0 0.0
    %1284 = vmatpush1.msra.mxu0 0.0
    %1285 = vmatprep.subr.mxu0 0.0
    %1286 = vmatpush1.msra.mxu0 0.0
    %1287 = vmatprep.subr.mxu0 0.0
    %1288 = vmatpush1.msra.mxu0 0.0
    %1289 = vmatprep.subr.mxu0 0.0
    %1290 = vmatpush1.msra.mxu0 0.0
    %1291 = vmatprep.subr.mxu0 0.0
    %1292 = vmatpush1.msra.mxu0 0.0
    %1293 = vmatprep.subr.mxu0 0.0
    %1294 = vmatpush1.msra.mxu0 0.0
    %1295 = vmatprep.subr.mxu0 0.0
    %1296 = vmatpush1.msra.mxu0 0.0
    %1297 = vmatprep.subr.mxu0 0.0
    %1298 = vmatpush1.msra.mxu0 0.0
    %1299 = vmatprep.subr.mxu0 0.0
    %1300 = vmatpush1.msra.mxu0 0.0
    %1301 = vmatprep.subr.mxu0 0.0
    %1302 = vmatpush1.msra.mxu0 0.0
    %1303 = vmatprep.subr.mxu0 0.0
    %1304 = vmatpush1.msra.mxu0 0.0
    %1305 = vmatprep.subr.mxu0 0.0
    %1306 = vmatpush1.msra.mxu0 0.0
    %1307 = vmatprep.mubr.f32.mxu0 0.0
    %1308 = vmatmul.mubr.f32.gmra.mrb[0].mxu0 %v1241
    %v1309 = vpop.f32.mrb[0].mxu0
    %v1310 = vadd.f32 0.0, %v1309
    %v1311 = vpop.f32.mrb[0].mxu0
    %1312 = vdwg.mxu0
    %v1313 = vrcp.pop %v1236
    %v1314 = vmul.f32 %v1310, %v1313
    %1315 = vrot.lane.b32.xlu0 %v139, 104
    %v1316 = vpop.permute.xlu0 %1315
    %1317 = vrot.lane.b32.xlu0 %v135, 72
    %v1318 = vpop.permute.xlu0 %1317
    %v1319 = vsel %vm143, %v1316, 0
    %v1321 = vsel %vm143, %v1318, 0
    %1323 = vmatprep.subr.mxu0 0.0
    %1324 = vmatpush1.xpose.msra.mxu0 %v1321
    %1325 = vmatprep.subr.mxu0 0.0
    %1326 = vmatpush1.xpose.msra.mxu0 0.0
    %1327 = vmatprep.subr.mxu0 0.0
    %1328 = vmatpush1.xpose.msra.mxu0 0.0
    %1329 = vmatprep.subr.mxu0 0.0
    %1330 = vmatpush1.xpose.msra.mxu0 0.0
    %1331 = vmatprep.subr.mxu0 0.0
    %1332 = vmatpush1.xpose.msra.mxu0 0.0
    %1333 = vmatprep.subr.mxu0 0.0
    %1334 = vmatpush1.xpose.msra.mxu0 0.0
    %1335 = vmatprep.subr.mxu0 0.0
    %1336 = vmatpush1.xpose.msra.mxu0 0.0
    %1337 = vmatprep.subr.mxu0 0.0
    %1338 = vmatpush1.xpose.msra.mxu0 0.0
    %1339 = vmatprep.subr.mxu0 0.0
    %1340 = vmatpush1.xpose.msra.mxu0 0.0
    %1341 = vmatprep.subr.mxu0 0.0
    %1342 = vmatpush1.xpose.msra.mxu0 0.0
    %1343 = vmatprep.subr.mxu0 0.0
    %1344 = vmatpush1.xpose.msra.mxu0 0.0
    %1345 = vmatprep.subr.mxu0 0.0
    %1346 = vmatpush1.xpose.msra.mxu0 0.0
    %1347 = vmatprep.subr.mxu0 0.0
    %1348 = vmatpush1.xpose.msra.mxu0 0.0
    %1349 = vmatprep.subr.mxu0 0.0
    %1350 = vmatpush1.xpose.msra.mxu0 0.0
    %1351 = vmatprep.subr.mxu0 0.0
    %1352 = vmatpush1.xpose.msra.mxu0 0.0
    %1353 = vmatprep.subr.mxu0 0.0
    %1354 = vmatpush1.xpose.msra.mxu0 0.0
    %1355 = vmatprep.subr.mxu0 0.0
    %1356 = vmatpush1.xpose.msra.mxu0 0.0
    %1357 = vmatprep.subr.mxu0 0.0
    %1358 = vmatpush1.xpose.msra.mxu0 0.0
    %1359 = vmatprep.subr.mxu0 0.0
    %1360 = vmatpush1.xpose.msra.mxu0 0.0
    %1361 = vmatprep.subr.mxu0 0.0
    %1362 = vmatpush1.xpose.msra.mxu0 0.0
    %1363 = vmatprep.subr.mxu0 0.0
    %1364 = vmatpush1.xpose.msra.mxu0 0.0
    %1365 = vmatprep.subr.mxu0 0.0
    %1366 = vmatpush1.xpose.msra.mxu0 0.0
    %1367 = vmatprep.subr.mxu0 0.0
    %1368 = vmatpush1.xpose.msra.mxu0 0.0
    %1369 = vmatprep.subr.mxu0 0.0
    %1370 = vmatpush1.xpose.msra.mxu0 0.0
    %1371 = vmatprep.subr.mxu0 0.0
    %1372 = vmatpush1.xpose.msra.mxu0 0.0
    %1373 = vmatprep.subr.mxu0 0.0
    %1374 = vmatpush1.xpose.msra.mxu0 0.0
    %1375 = vmatprep.subr.mxu0 0.0
    %1376 = vmatpush1.xpose.msra.mxu0 0.0
    %1377 = vmatprep.subr.mxu0 0.0
    %1378 = vmatpush1.xpose.msra.mxu0 0.0
    %1379 = vmatprep.subr.mxu0 0.0
    %1380 = vmatpush1.xpose.msra.mxu0 0.0
    %1381 = vmatprep.subr.mxu0 0.0
    %1382 = vmatpush1.xpose.msra.mxu0 0.0
    %1383 = vmatprep.subr.mxu0 0.0
    %1384 = vmatpush1.xpose.msra.mxu0 0.0
    %1385 = vmatprep.subr.mxu0 0.0
    %1386 = vmatpush1.xpose.msra.mxu0 0.0
    %1387 = vmatprep.mubr.f32.mxu0 0.0
    %1388 = vmatmul.mubr.f32.gmra.mrb[0].mxu0 %v1319
    %v1389 = vpop.f32.mrb[0].mxu0
    %v1390 = vadd.f32 0.0, %v1389
    %v1391 = vpop.f32.mrb[0].mxu0
    %1392 = vdwg.mxu0
    %v1393 = vsel %vm143, %v1390, -inf
    %1394 = vmax.xlane.f32.xlu0 %v1393
    %v1395 = vpop.xlane.xlu0 %1394
    %v1396 = vsub.f32 %v1390, %v1395
    %v1397 = vmul.f32 %v1396, 1.442695
    %v1398 = vpow.pop %v1397
    %v1399 = vsel %vm143, %v1398, 0.0
    %1400 = vadd.xlane.f32.xlu0 %v1399
    %v1401 = vpop.xlane.xlu0 %1400
    %1402 = vrot.lane.b32.xlu0 %v135, 40
    %v1403 = vpop.permute.xlu0 %1402
    %v1406 = vsel %vm143, %v1398, 0
    %1408 = vmatprep.subr.mxu0 0.0
    %1409 = vmatpush1.msra.mxu0 %v1403
    %1410 = vmatprep.subr.mxu0 0.0
    %1411 = vmatpush1.msra.mxu0 0.0
    %1412 = vmatprep.subr.mxu0 0.0
    %1413 = vmatpush1.msra.mxu0 0.0
    %1414 = vmatprep.subr.mxu0 0.0
    %1415 = vmatpush1.msra.mxu0 0.0
    %1416 = vmatprep.subr.mxu0 0.0
    %1417 = vmatpush1.msra.mxu0 0.0
    %1418 = vmatprep.subr.mxu0 0.0
    %1419 = vmatpush1.msra.mxu0 0.0
    %1420 = vmatprep.subr.mxu0 0.0
    %1421 = vmatpush1.msra.mxu0 0.0
    %1422 = vmatprep.subr.mxu0 0.0
    %1423 = vmatpush1.msra.mxu0 0.0
    %1424 = vmatprep.subr.mxu0 0.0
    %1425 = vmatpush1.msra.mxu0 0.0
    %1426 = vmatprep.subr.mxu0 0.0
    %1427 = vmatpush1.msra.mxu0 0.0
    %1428 = vmatprep.subr.mxu0 0.0
    %1429 = vmatpush1.msra.mxu0 0.0
    %1430 = vmatprep.subr.mxu0 0.0
    %1431 = vmatpush1.msra.mxu0 0.0
    %1432 = vmatprep.subr.mxu0 0.0
    %1433 = vmatpush1.msra.mxu0 0.0
    %1434 = vmatprep.subr.mxu0 0.0
    %1435 = vmatpush1.msra.mxu0 0.0
    %1436 = vmatprep.subr.mxu0 0.0
    %1437 = vmatpush1.msra.mxu0 0.0
    %1438 = vmatprep.subr.mxu0 0.0
    %1439 = vmatpush1.msra.mxu0 0.0
    %1440 = vmatprep.subr.mxu0 0.0
    %1441 = vmatpush1.msra.mxu0 0.0
    %1442 = vmatprep.subr.mxu0 0.0
    %1443 = vmatpush1.msra.mxu0 0.0
    %1444 = vmatprep.subr.mxu0 0.0
    %1445 = vmatpush1.msra.mxu0 0.0
    %1446 = vmatprep.subr.mxu0 0.0
    %1447 = vmatpush1.msra.mxu0 0.0
    %1448 = vmatprep.subr.mxu0 0.0
    %1449 = vmatpush1.msra.mxu0 0.0
    %1450 = vmatprep.subr.mxu0 0.0
    %1451 = vmatpush1.msra.mxu0 0.0
    %1452 = vmatprep.subr.mxu0 0.0
    %1453 = vmatpush1.msra.mxu0 0.0
    %1454 = vmatprep.subr.mxu0 0.0
    %1455 = vmatpush1.msra.mxu0 0.0
    %1456 = vmatprep.subr.mxu0 0.0
    %1457 = vmatpush1.msra.mxu0 0.0
    %1458 = vmatprep.subr.mxu0 0.0
    %1459 = vmatpush1.msra.mxu0 0.0
    %1460 = vmatprep.subr.mxu0 0.0
    %1461 = vmatpush1.msra.mxu0 0.0
    %1462 = vmatprep.subr.mxu0 0.0
    %1463 = vmatpush1.msra.mxu0 0.0
    %1464 = vmatprep.subr.mxu0 0.0
    %1465 = vmatpush1.msra.mxu0 0.0
    %1466 = vmatprep.subr.mxu0 0.0
    %1467 = vmatpush1.msra.mxu0 0.0
    %1468 = vmatprep.subr.mxu0 0.0
    %1469 = vmatpush1.msra.mxu0 0.0
    %1470 = vmatprep.subr.mxu0 0.0
    %1471 = vmatpush1.msra.mxu0 0.0
    %1472 = vmatprep.mubr.f32.mxu0 0.0
    %1473 = vmatmul.mubr.f32.gmra.mrb[0].mxu0 %v1406
    %v1474 = vpop.f32.mrb[0].mxu0
    %v1475 = vadd.f32 0.0, %v1474
    %v1476 = vpop.f32.mrb[0].mxu0
    %1477 = vdwg.mxu0
    %v1478 = vrcp.pop %v1401
    %v1479 = vmul.f32 %v1475, %v1478
    %1481 = vrot.lane.b32.xlu0 %v1149, 8
    %v1482 = vpop.permute.xlu0 %1481
    %1485 = vrot.lane.b32.xlu0 %v1314, 16
    %v1486 = vpop.permute.xlu0 %1485
    %1489 = vrot.lane.b32.xlu0 %v1479, 24
    %v1490 = vpop.permute.xlu0 %1489
    %v1492 = vsel %vm143, %v984, %v1482
    %v1493 = vsel %vm814, %v1492, %v1486
    %v1494 = vsel %vm816, %v1493, %v1490
    %v1495 = vtanh.pop %v1494
    %s1496 = scalar_lea.vmem [#allocation7], 8
    %1497 = vst.msk [vmem:[%s1496] sm:$0xff] %vm56, %v1495
    // Predicated region
    $region22: #{tpu_custom_call.1} parent=1 // pred_check
      _
    $region23: #{tpu_custom_call.1} parent=1 // pred_check_branch
      %1499 = sbr.rel (0) target = $region25
    $region24: #{tpu_custom_call.1} parent=1 // pred_region
      %s1501 = ssub.s32 256, 256
      %1502 = vsyncadd [#allocation4], %s1501
      %s1503 = sshll.u32 [#allocation7], 4
      %s1504 = int_to_ptr.vmem [resolvable:$true] %s1503
      %1509 = dma.vmem_to_hbm [thread:$0]  %s1504, 256, %s3, [#allocation4], 128, 128, 8
    $region25: #{tpu_custom_call.1} parent=1 // pred_fallthru
      _
    // Predicated region
    $region26: #{tpu_custom_call.1} parent=1 // pred_check
      _
    $region27: #{tpu_custom_call.1} parent=1 // pred_check_branch
      %1511 = sbr.rel (0) target = $region29
    $region28: #{tpu_custom_call.1} parent=1 // pred_region
      %1512 = dma.done [#allocation4], 256
    $region29: #{tpu_custom_call.1} parent=1 // pred_fallthru
      _
    %1513 = vsyncpa [#allocation3], 1
    %1514 = vsyncpa [#allocation6], 1
    %1515 = vsyncpa [#allocation4], 1

</llo_original>
